<compile_context>
chip_gen: v7x
topology: tpu7x:2x2x1
jax: 0.10.0
libtpu: 0.0.40
codegen_flags: <defaults>
</compile_context>

<pallas_src>
import jax
import jax.numpy as jnp
from jax.experimental import pallas as pl
from jax.experimental.pallas import tpu as pltpu

_BATCH_TILE = 256  # max tokens per grid step (multiple of 8)


def _round_up(n: int, m: int) -> int:
    return (n + m - 1) // m * m


# ------------------------------- kernel --------------------------------------
def _fused_experts_kernel(x_ref, w1_ref, b1_ref, w2_ref, b2_ref, o_ref):
    """out[:, e*Dp:(e+1)*Dp] = relu(x @ w1[:, e] + b1[e]) @ w2[e] + b2[e].

    x_ref : (tb, Din)        bf16
    w1_ref: (Din, E*Hp)      bf16   (expert-major column packing)
    b1_ref: (1, E*Hp)        f32
    w2_ref: (E, Hp, Dp)      bf16
    b2_ref: (1, E*Dp)        f32
    o_ref : (tb, E*Dp)       f32    (E*Dp is a multiple of 128 -> lane-dense)
    """
    E, Hp, Dp = w2_ref.shape

    # First matmul (MXU, bf16 in / f32 acc), bias + ReLU in f32. Hidden
    # activation never leaves VMEM/vregs.
    h = jnp.maximum(
        jnp.dot(x_ref[...], w1_ref[...], preferred_element_type=jnp.float32)
        + b1_ref[...],
        0.0,
    )
    h = h.astype(w2_ref.dtype)  # bf16 for the second MXU pass

    # Per-expert second matmul: statically unrolled dots (no block-diagonal
    # zero padding), concatenated in-register into one lane-dense value.
    outs = []
    for e in range(E):
        he = h[:, e * Hp:(e + 1) * Hp]                       # (tb, Hp)
        outs.append(jnp.dot(he, w2_ref[e],
                            preferred_element_type=jnp.float32))  # (tb, Dp)
    out = outs[0] if E == 1 else jnp.concatenate(outs, axis=-1)   # (tb, E*Dp)
    o_ref[...] = out + b2_ref[...]


# ------------------------------ wrappers --------------------------------------
@jax.jit
def experts_forward(x, w1, b1, w2, b2):
    """All experts fused in ONE pallas_call.

    x : (B, Din) float            w1: (E, Din, H)   b1: (E, H)
                                  w2: (E, H, Dout)  b2: (E, Dout)
    Returns (B, E, Dout) float32 with
      out[b, e] = relu(x[b] @ w1[e] + b1[e]) @ w2[e] + b2[e]
    Weight packing / padding happens here (not at the call site).
    """
    B, Din = x.shape
    E, _, H = w1.shape
    Dout = w2.shape[-1]
    f32, bf16 = jnp.float32, jnp.bfloat16

    # Pad per-expert hidden / output widths so the stacked lane widths are
    # multiples of 128 (lane-dense hidden writes and output stores).
    Hp = H if (E * H) % 128 == 0 else _round_up(H, 128)
    Dp = Dout if (E * Dout) % 128 == 0 else _round_up(Dout, 128)

    # Batch tiling: pad to a sublane multiple; one grid step per batch tile.
    tile_b = min(_round_up(B, 8), _BATCH_TILE)
    Bp = _round_up(B, tile_b)

    # bf16 matmul operands (DMA bytes halved, native MXU rate); f32 biases.
    xp = jnp.zeros((Bp, Din), bf16).at[:B].set(x.astype(bf16))

    w1p = jnp.zeros((E, Din, Hp), bf16).at[:, :, :H].set(w1.astype(bf16))
    w1s = jnp.transpose(w1p, (1, 0, 2)).reshape(Din, E * Hp)   # expert-major cols
    b1p = jnp.zeros((E, Hp), f32).at[:, :H].set(b1.astype(f32)).reshape(1, E * Hp)

    w2p = jnp.zeros((E, Hp, Dp), bf16).at[:, :H, :Dout].set(w2.astype(bf16))
    b2p = jnp.zeros((E, Dp), f32).at[:, :Dout].set(b2.astype(f32)).reshape(1, E * Dp)

    grid = (Bp // tile_b,)
    out = pl.pallas_call(
        _fused_experts_kernel,
        out_shape=jax.ShapeDtypeStruct((Bp, E * Dp), f32),
        grid=grid,
        in_specs=[
            pl.BlockSpec((tile_b, Din), lambda i: (i, 0)),       # x: batch-tiled
            pl.BlockSpec((Din, E * Hp), lambda i: (0, 0)),       # w1: resident
            pl.BlockSpec((1, E * Hp), lambda i: (0, 0)),         # b1
            pl.BlockSpec((E, Hp, Dp), lambda i: (0, 0, 0)),      # w2
            pl.BlockSpec((1, E * Dp), lambda i: (0, 0)),         # b2
        ],
        out_specs=pl.BlockSpec((tile_b, E * Dp), lambda i: (i, 0)),
        compiler_params=pltpu.CompilerParams(
            dimension_semantics=("parallel",)),   # batch tiles shard across TCs
    )(xp, w1s, b1p, w2p, b2p)

    return out.reshape(Bp, E, Dp)[:B, :, :Dout]


@jax.jit
def expert_forward(x, w1, b1, w2, b2):
    """The literal PyTorch `Expert` module: fc2(relu(fc1(x))).

    w1: (Din, H)  b1: (H,)  w2: (H, Dout)  b2: (Dout,) -> (B, Dout) f32.
    Routed through the padded kernel (H, Dout padded to 128 -> lane-dense).
    """
    return experts_forward(x, w1[None], b1[None], w2[None], b2[None])[:, 0, :]


# -------------------------------- main -----------------------------------------
if __name__ == "__main__":
    INPUT_DIM = 64     # moe_global_input_dim
    HIDDEN_DIM = 32    # moe_hidden_dim_expert
    OUTPUT_DIM = 16    # moe_output_dim
    NUM_EXPERTS = 8    # E*H = 256 (fills 256-wide MXU), E*Dout = 128 (lane-dense)
    BATCH = 128        # amortise launch overhead

    key = jax.random.PRNGKey(0)
    kx, k1, k2, k3, k4 = jax.random.split(key, 5)
    x = jax.random.normal(kx, (BATCH, INPUT_DIM), jnp.float32)

    bound1 = 1.0 / (INPUT_DIM ** 0.5)
    bound2 = 1.0 / (HIDDEN_DIM ** 0.5)
    w1 = jax.random.uniform(k1, (NUM_EXPERTS, INPUT_DIM, HIDDEN_DIM),
                            jnp.float32, -bound1, bound1)
    b1 = jax.random.uniform(k2, (NUM_EXPERTS, HIDDEN_DIM),
                            jnp.float32, -bound1, bound1)
    w2 = jax.random.uniform(k3, (NUM_EXPERTS, HIDDEN_DIM, OUTPUT_DIM),
                            jnp.float32, -bound2, bound2)
    b2 = jax.random.uniform(k4, (NUM_EXPERTS, OUTPUT_DIM),
                            jnp.float32, -bound2, bound2)

    # All experts in one fused launch.
    out = experts_forward(x, w1, b1, w2, b2)                 # (B, E, Dout)
    # Single Expert (matches the PyTorch module exactly).
    y0 = expert_forward(x, w1[0], b1[0], w2[0], b2[0])       # (B, Dout)
    jax.block_until_ready((out, y0))

    # --- references ---
    # Tight reference: same bf16 rounding of matmul operands as the kernel.
    xb = x.astype(jnp.bfloat16).astype(jnp.float32)
    w1b = w1.astype(jnp.bfloat16).astype(jnp.float32)
    w2b = w2.astype(jnp.bfloat16).astype(jnp.float32)
    h_ref = jnp.maximum(jnp.einsum("bd,edh->beh", xb, w1b) + b1[None], 0.0)
    h_ref = h_ref.astype(jnp.bfloat16).astype(jnp.float32)
    ref_bf16 = jnp.einsum("beh,eho->beo", h_ref, w2b) + b2[None]
    # Loose reference: pure f32 PyTorch semantics (bf16 matmuls are a
    # deliberate perf choice per review, so tolerance is wider here).
    h_f32 = jnp.maximum(jnp.einsum("bd,edh->beh", x, w1) + b1[None], 0.0)
    ref_f32 = jnp.einsum("beh,eho->beo", h_f32, w2) + b2[None]

    assert out.shape == (BATCH, NUM_EXPERTS, OUTPUT_DIM)
    assert y0.shape == (BATCH, OUTPUT_DIM)
    assert bool(jnp.all(jnp.isfinite(out)))
    assert bool(jnp.all(jnp.isfinite(y0)))
    assert jnp.allclose(out, ref_bf16, atol=2e-3, rtol=2e-3)
    assert jnp.allclose(out, ref_f32, atol=1e-1, rtol=5e-2)
    assert jnp.allclose(y0, out[:, 0, :], atol=1e-5, rtol=1e-5)
    print("KERNEL_OK")
</pallas_src>

<mosaic_0001>
module attributes {stable_mosaic.version = 11 : i64} {
  func.func @_fused_experts_kernel(%arg0: i32, %arg1: memref<128x64xbf16, #tpu.memory_space<vmem>>, %arg2: memref<64x256xbf16, #tpu.memory_space<vmem>>, %arg3: memref<1x256xf32, #tpu.memory_space<vmem>>, %arg4: memref<8x32x16xbf16, #tpu.memory_space<vmem>>, %arg5: memref<1x128xf32, #tpu.memory_space<vmem>>, %arg6: memref<128x128xf32, #tpu.memory_space<vmem>>) attributes {dimension_semantics = [#tpu.dimension_semantics<parallel>], iteration_bounds = array<i64: 1>, scalar_prefetch = 0 : i64, scratch_operands = 0 : i64, tpu.core_type = #tpu.core_type<tc>, window_params = [{transform_indices = @transform_0, window_bounds = array<i64: 128, 64>}, {pipeline_mode = #tpu.pipeline_mode<synchronous>, transform_indices = @transform_1, window_bounds = array<i64: 64, 256>}, {pipeline_mode = #tpu.pipeline_mode<synchronous>, transform_indices = @transform_2, window_bounds = array<i64: 1, 256>}, {pipeline_mode = #tpu.pipeline_mode<synchronous>, transform_indices = @transform_3, window_bounds = array<i64: 8, 32, 16>}, {pipeline_mode = #tpu.pipeline_mode<synchronous>, transform_indices = @transform_4, window_bounds = array<i64: 1, 128>}, {transform_indices = @transform_5, window_bounds = array<i64: 128, 128>}]} {
    %c0 = arith.constant 0 : index
    %c0_0 = arith.constant 0 : index
    %0 = vector.load %arg1[%c0, %c0_0] : memref<128x64xbf16, #tpu.memory_space<vmem>>, vector<128x64xbf16>
    %c0_1 = arith.constant 0 : index
    %c0_2 = arith.constant 0 : index
    %1 = vector.load %arg2[%c0_1, %c0_2] : memref<64x256xbf16, #tpu.memory_space<vmem>>, vector<64x256xbf16>
    %cst = arith.constant dense<0.000000e+00> : vector<128x256xf32>
    %2 = tpu.matmul %0, %1, %cst {dimension_numbers = #tpu.dot_dimension_numbers<[1], [0], [0], [1], [0, 0, 1, 1], [], []>} : vector<128x64xbf16>, vector<64x256xbf16>, vector<128x256xf32> -> vector<128x256xf32>
    %c0_3 = arith.constant 0 : index
    %c0_4 = arith.constant 0 : index
    %3 = vector.load %arg3[%c0_3, %c0_4] : memref<1x256xf32, #tpu.memory_space<vmem>>, vector<1x256xf32>
    %4 = vector.broadcast %3 : vector<1x256xf32> to vector<128x256xf32>
    %5 = arith.addf %2, %4 : vector<128x256xf32>
    %cst_5 = arith.constant 0.000000e+00 : f32
    %6 = vector.broadcast %cst_5 : f32 to vector<128x256xf32>
    %7 = arith.maximumf %5, %6 : vector<128x256xf32>
    %8 = arith.truncf %7 : vector<128x256xf32> to vector<128x256xbf16>
    %9 = vector.extract_strided_slice %8 {offsets = [0, 0], sizes = [128, 32], strides = [1, 1]} : vector<128x256xbf16> to vector<128x32xbf16>
    %c0_6 = arith.constant 0 : index
    %c0_7 = arith.constant 0 : index
    %c0_8 = arith.constant 0 : index
    %10 = vector.load %arg4[%c0_6, %c0_7, %c0_8] : memref<8x32x16xbf16, #tpu.memory_space<vmem>>, vector<1x32x16xbf16>
    %11 = vector.shape_cast %10 : vector<1x32x16xbf16> to vector<32x16xbf16>
    %cst_9 = arith.constant dense<0.000000e+00> : vector<128x16xf32>
    %12 = tpu.matmul %9, %11, %cst_9 {dimension_numbers = #tpu.dot_dimension_numbers<[1], [0], [0], [1], [0, 0, 1, 1], [], []>} : vector<128x32xbf16>, vector<32x16xbf16>, vector<128x16xf32> -> vector<128x16xf32>
    %13 = vector.extract_strided_slice %8 {offsets = [0, 32], sizes = [128, 32], strides = [1, 1]} : vector<128x256xbf16> to vector<128x32xbf16>
    %c1 = arith.constant 1 : index
    %c0_10 = arith.constant 0 : index
    %c0_11 = arith.constant 0 : index
    %14 = vector.load %arg4[%c1, %c0_10, %c0_11] : memref<8x32x16xbf16, #tpu.memory_space<vmem>>, vector<1x32x16xbf16>
    %15 = vector.shape_cast %14 : vector<1x32x16xbf16> to vector<32x16xbf16>
    %cst_12 = arith.constant dense<0.000000e+00> : vector<128x16xf32>
    %16 = tpu.matmul %13, %15, %cst_12 {dimension_numbers = #tpu.dot_dimension_numbers<[1], [0], [0], [1], [0, 0, 1, 1], [], []>} : vector<128x32xbf16>, vector<32x16xbf16>, vector<128x16xf32> -> vector<128x16xf32>
    %17 = vector.extract_strided_slice %8 {offsets = [0, 64], sizes = [128, 32], strides = [1, 1]} : vector<128x256xbf16> to vector<128x32xbf16>
    %c2 = arith.constant 2 : index
    %c0_13 = arith.constant 0 : index
    %c0_14 = arith.constant 0 : index
    %18 = vector.load %arg4[%c2, %c0_13, %c0_14] : memref<8x32x16xbf16, #tpu.memory_space<vmem>>, vector<1x32x16xbf16>
    %19 = vector.shape_cast %18 : vector<1x32x16xbf16> to vector<32x16xbf16>
    %cst_15 = arith.constant dense<0.000000e+00> : vector<128x16xf32>
    %20 = tpu.matmul %17, %19, %cst_15 {dimension_numbers = #tpu.dot_dimension_numbers<[1], [0], [0], [1], [0, 0, 1, 1], [], []>} : vector<128x32xbf16>, vector<32x16xbf16>, vector<128x16xf32> -> vector<128x16xf32>
    %21 = vector.extract_strided_slice %8 {offsets = [0, 96], sizes = [128, 32], strides = [1, 1]} : vector<128x256xbf16> to vector<128x32xbf16>
    %c3 = arith.constant 3 : index
    %c0_16 = arith.constant 0 : index
    %c0_17 = arith.constant 0 : index
    %22 = vector.load %arg4[%c3, %c0_16, %c0_17] : memref<8x32x16xbf16, #tpu.memory_space<vmem>>, vector<1x32x16xbf16>
    %23 = vector.shape_cast %22 : vector<1x32x16xbf16> to vector<32x16xbf16>
    %cst_18 = arith.constant dense<0.000000e+00> : vector<128x16xf32>
    %24 = tpu.matmul %21, %23, %cst_18 {dimension_numbers = #tpu.dot_dimension_numbers<[1], [0], [0], [1], [0, 0, 1, 1], [], []>} : vector<128x32xbf16>, vector<32x16xbf16>, vector<128x16xf32> -> vector<128x16xf32>
    %25 = vector.extract_strided_slice %8 {offsets = [0, 128], sizes = [128, 32], strides = [1, 1]} : vector<128x256xbf16> to vector<128x32xbf16>
    %c4 = arith.constant 4 : index
    %c0_19 = arith.constant 0 : index
    %c0_20 = arith.constant 0 : index
    %26 = vector.load %arg4[%c4, %c0_19, %c0_20] : memref<8x32x16xbf16, #tpu.memory_space<vmem>>, vector<1x32x16xbf16>
    %27 = vector.shape_cast %26 : vector<1x32x16xbf16> to vector<32x16xbf16>
    %cst_21 = arith.constant dense<0.000000e+00> : vector<128x16xf32>
    %28 = tpu.matmul %25, %27, %cst_21 {dimension_numbers = #tpu.dot_dimension_numbers<[1], [0], [0], [1], [0, 0, 1, 1], [], []>} : vector<128x32xbf16>, vector<32x16xbf16>, vector<128x16xf32> -> vector<128x16xf32>
    %29 = vector.extract_strided_slice %8 {offsets = [0, 160], sizes = [128, 32], strides = [1, 1]} : vector<128x256xbf16> to vector<128x32xbf16>
    %c5 = arith.constant 5 : index
    %c0_22 = arith.constant 0 : index
    %c0_23 = arith.constant 0 : index
    %30 = vector.load %arg4[%c5, %c0_22, %c0_23] : memref<8x32x16xbf16, #tpu.memory_space<vmem>>, vector<1x32x16xbf16>
    %31 = vector.shape_cast %30 : vector<1x32x16xbf16> to vector<32x16xbf16>
    %cst_24 = arith.constant dense<0.000000e+00> : vector<128x16xf32>
    %32 = tpu.matmul %29, %31, %cst_24 {dimension_numbers = #tpu.dot_dimension_numbers<[1], [0], [0], [1], [0, 0, 1, 1], [], []>} : vector<128x32xbf16>, vector<32x16xbf16>, vector<128x16xf32> -> vector<128x16xf32>
    %33 = vector.extract_strided_slice %8 {offsets = [0, 192], sizes = [128, 32], strides = [1, 1]} : vector<128x256xbf16> to vector<128x32xbf16>
    %c6 = arith.constant 6 : index
    %c0_25 = arith.constant 0 : index
    %c0_26 = arith.constant 0 : index
    %34 = vector.load %arg4[%c6, %c0_25, %c0_26] : memref<8x32x16xbf16, #tpu.memory_space<vmem>>, vector<1x32x16xbf16>
    %35 = vector.shape_cast %34 : vector<1x32x16xbf16> to vector<32x16xbf16>
    %cst_27 = arith.constant dense<0.000000e+00> : vector<128x16xf32>
    %36 = tpu.matmul %33, %35, %cst_27 {dimension_numbers = #tpu.dot_dimension_numbers<[1], [0], [0], [1], [0, 0, 1, 1], [], []>} : vector<128x32xbf16>, vector<32x16xbf16>, vector<128x16xf32> -> vector<128x16xf32>
    %37 = vector.extract_strided_slice %8 {offsets = [0, 224], sizes = [128, 32], strides = [1, 1]} : vector<128x256xbf16> to vector<128x32xbf16>
    %c7 = arith.constant 7 : index
    %c0_28 = arith.constant 0 : index
    %c0_29 = arith.constant 0 : index
    %38 = vector.load %arg4[%c7, %c0_28, %c0_29] : memref<8x32x16xbf16, #tpu.memory_space<vmem>>, vector<1x32x16xbf16>
    %39 = vector.shape_cast %38 : vector<1x32x16xbf16> to vector<32x16xbf16>
    %cst_30 = arith.constant dense<0.000000e+00> : vector<128x16xf32>
    %40 = tpu.matmul %37, %39, %cst_30 {dimension_numbers = #tpu.dot_dimension_numbers<[1], [0], [0], [1], [0, 0, 1, 1], [], []>} : vector<128x32xbf16>, vector<32x16xbf16>, vector<128x16xf32> -> vector<128x16xf32>
    %41 = tpu.concatenate %12, %16, %20, %24, %28, %32, %36, %40 in 1 : vector<128x16xf32>, vector<128x16xf32>, vector<128x16xf32>, vector<128x16xf32>, vector<128x16xf32>, vector<128x16xf32>, vector<128x16xf32>, vector<128x16xf32> -> vector<128x128xf32>
    %c0_31 = arith.constant 0 : index
    %c0_32 = arith.constant 0 : index
    %42 = vector.load %arg5[%c0_31, %c0_32] : memref<1x128xf32, #tpu.memory_space<vmem>>, vector<1x128xf32>
    %43 = vector.broadcast %42 : vector<1x128xf32> to vector<128x128xf32>
    %44 = arith.addf %41, %43 : vector<128x128xf32>
    %c0_33 = arith.constant 0 : index
    %c0_34 = arith.constant 0 : index
    %45 = vector.load %arg6[%c0_33, %c0_34] : memref<128x128xf32, #tpu.memory_space<vmem>>, vector<128x128xf32>
    tpu.vector_store %arg6[%c0_33, %c0_34], %44 {strides = array<i32>} : memref<128x128xf32, #tpu.memory_space<vmem>>, vector<128x128xf32>,
    return
  }
  func.func @transform_0(%arg0: i32) -> (i32, i32) {
    %c0_i32 = arith.constant 0 : i32
    %c0_i32_0 = arith.constant 0 : i32
    return %arg0, %c0_i32 : i32, i32
  }
  func.func @transform_1(%arg0: i32) -> (i32, i32) {
    %c0_i32 = arith.constant 0 : i32
    %c0_i32_0 = arith.constant 0 : i32
    %c0_i32_1 = arith.constant 0 : i32
    return %c0_i32, %c0_i32_0 : i32, i32
  }
  func.func @transform_2(%arg0: i32) -> (i32, i32) {
    %c0_i32 = arith.constant 0 : i32
    %c0_i32_0 = arith.constant 0 : i32
    %c0_i32_1 = arith.constant 0 : i32
    return %c0_i32, %c0_i32_0 : i32, i32
  }
  func.func @transform_3(%arg0: i32) -> (i32, i32, i32) {
    %c0_i32 = arith.constant 0 : i32
    %c0_i32_0 = arith.constant 0 : i32
    %c0_i32_1 = arith.constant 0 : i32
    %c0_i32_2 = arith.constant 0 : i32
    return %c0_i32, %c0_i32_0, %c0_i32_1 : i32, i32, i32
  }
  func.func @transform_4(%arg0: i32) -> (i32, i32) {
    %c0_i32 = arith.constant 0 : i32
    %c0_i32_0 = arith.constant 0 : i32
    %c0_i32_1 = arith.constant 0 : i32
    return %c0_i32, %c0_i32_0 : i32, i32
  }
  func.func @transform_5(%arg0: i32) -> (i32, i32) {
    %c0_i32 = arith.constant 0 : i32
    %c0_i32_0 = arith.constant 0 : i32
    return %arg0, %c0_i32 : i32, i32
  }
}

</mosaic_0001>

<llo_original>
// kernel: experts_forward.1
$region0: #{experts_forward.1}
  #allocation0 [shape = 'u32[]', space=smem, size = 0x4, offset = 0x4, fixed_abs, tag = 'smem constant byte address 0x4 - core index']
  #allocation1 [shape = 'u32[144,128]{1,0:T(1,128)}', space=vmem, size = 0x12000, scoped, tag = 'internal scratch']
  %s0 = inlined_call_operand.vmem [shape: bf16[128,64], index: 0, kind: input, shape index: {}]
  %s1 = inlined_call_operand.vmem [shape: bf16[64,256], index: 1, kind: input, shape index: {}]
  %s2 = inlined_call_operand.vmem [shape: f32[1,256], index: 2, kind: input, shape index: {}]
  %s3 = inlined_call_operand.vmem [shape: bf16[8,32,16], index: 3, kind: input, shape index: {}]
  %s4 = inlined_call_operand.vmem [shape: f32[1,128], index: 4, kind: input, shape index: {}]
  %s5 = inlined_call_operand.vmem [shape: f32[128,128], index: 5, kind: output, shape index: {}]
  %s6 = sld [smem:[#allocation0]]
  $region30: #{experts_forward.1} parent=0
    _
  %s8 = ssub.s32 1, %s6
  %s9 = scalar_select 0, %s8, %s6
  // Predicated region
  $region2: #{experts_forward.1} parent=0 // pred_check
    _
  $region3: #{experts_forward.1} parent=0 // pred_check_branch
    %11 = sbr.rel (0) target = $region5
  $region4: #{experts_forward.1} parent=0 // pred_region
    _
  $region5: #{experts_forward.1} parent=0 // pred_fallthru
    _
  // Predicated region
  $region6: #{experts_forward.1} parent=0 // pred_check
    _
  $region7: #{experts_forward.1} parent=0 // pred_check_branch
    %13 = sbr.rel (0) target = $region9
  $region8: #{experts_forward.1} parent=0 // pred_region
    _
  $region9: #{experts_forward.1} parent=0 // pred_fallthru
    _
  // Predicated region
  $region10: #{experts_forward.1} parent=0 // pred_check
    _
  $region11: #{experts_forward.1} parent=0 // pred_check_branch
    %15 = sbr.rel (0) target = $region13
  $region12: #{experts_forward.1} parent=0 // pred_region
    _
  $region13: #{experts_forward.1} parent=0 // pred_fallthru
    _
  // Predicated region
  $region14: #{experts_forward.1} parent=0 // pred_check
    _
  $region15: #{experts_forward.1} parent=0 // pred_check_branch
    %17 = sbr.rel (0) target = $region17
  $region16: #{experts_forward.1} parent=0 // pred_region
    _
  $region17: #{experts_forward.1} parent=0 // pred_fallthru
    _
  // Predicated region
  $region18: #{experts_forward.1} parent=0 // pred_check
    _
  $region19: #{experts_forward.1} parent=0 // pred_check_branch
    %19 = sbr.rel (0) target = $region21
  $region20: #{experts_forward.1} parent=0 // pred_region
    _
  $region21: #{experts_forward.1} parent=0 // pred_fallthru
    _
  %v21 = vld [vmem:[%s0] sm:$0xf]
  %v22 = vld [vmem:[%s0 + $0x4] sm:$0xf]
  %v23 = vld [vmem:[%s0 + $0x8] sm:$0xf]
  %v24 = vld [vmem:[%s0 + $0xc] sm:$0xf]
  %v25 = vld [vmem:[%s0 + $0x10] sm:$0xf]
  %v26 = vld [vmem:[%s0 + $0x14] sm:$0xf]
  %v27 = vld [vmem:[%s0 + $0x18] sm:$0xf]
  %v28 = vld [vmem:[%s0 + $0x1c] sm:$0xf]
  %v29 = vld [vmem:[%s0 + $0x20] sm:$0xf]
  %v30 = vld [vmem:[%s0 + $0x24] sm:$0xf]
  %v31 = vld [vmem:[%s0 + $0x28] sm:$0xf]
  %v32 = vld [vmem:[%s0 + $0x2c] sm:$0xf]
  %v33 = vld [vmem:[%s0 + $0x30] sm:$0xf]
  %v34 = vld [vmem:[%s0 + $0x34] sm:$0xf]
  %v35 = vld [vmem:[%s0 + $0x38] sm:$0xf]
  %v36 = vld [vmem:[%s0 + $0x3c] sm:$0xf]
  %v37 = vld [vmem:[%s1] sm:$0xff]
  %v38 = vld [vmem:[%s1 + $0x8] sm:$0xff]
  %v39 = vld [vmem:[%s1 + $0x10] sm:$0xff]
  %v40 = vld [vmem:[%s1 + $0x18] sm:$0xff]
  %v41 = vld [vmem:[%s1 + $0x20] sm:$0xff]
  %v42 = vld [vmem:[%s1 + $0x28] sm:$0xff]
  %v43 = vld [vmem:[%s1 + $0x30] sm:$0xff]
  %v44 = vld [vmem:[%s1 + $0x38] sm:$0xff]
  %v45 = vld [vmem:[%s2] sm:$0x3]
  %v47 = vlaneseq
  %v48 = vshrl.u32 %v47, 7
  %v49 = vsub.s32 0, %v48
  %v50 = vrot.slane %v45, %v49
  %v51 = vlaneseq
  %v52 = vshrl.u32 %v51, 7
  %v53 = vsub.s32 1, %v52
  %v54 = vrot.slane %v45, %v53
  %v73 = vunpack.c.l.b16 %v21
  %v74 = vunpack.c.l.b16 %v22
  %v75 = vunpack.c.l.b16 %v23
  %v76 = vunpack.c.l.b16 %v24
  %v77 = vunpack.c.l.b16 %v25
  %v78 = vunpack.c.l.b16 %v26
  %v79 = vunpack.c.l.b16 %v27
  %v80 = vunpack.c.l.b16 %v28
  %v81 = vunpack.c.l.b16 %v29
  %v82 = vunpack.c.l.b16 %v30
  %v83 = vunpack.c.l.b16 %v31
  %v84 = vunpack.c.l.b16 %v32
  %v85 = vunpack.c.l.b16 %v33
  %v86 = vunpack.c.l.b16 %v34
  %v87 = vunpack.c.l.b16 %v35
  %v88 = vunpack.c.l.b16 %v36
  %v89 = vpack.c.b16 %v74, %v73
  %v90 = vpack.c.b16 %v76, %v75
  %v91 = vpack.c.b16 %v78, %v77
  %v92 = vpack.c.b16 %v80, %v79
  %v93 = vpack.c.b16 %v82, %v81
  %v94 = vpack.c.b16 %v84, %v83
  %v95 = vpack.c.b16 %v86, %v85
  %v96 = vpack.c.b16 %v88, %v87
  %v105 = vunpack.c.l.b16 %v37
  %v106 = vunpack.c.h.b16 %v37
  %v107 = vunpack.c.l.b16 %v38
  %v108 = vunpack.c.h.b16 %v38
  %v109 = vunpack.c.l.b16 %v39
  %v110 = vunpack.c.h.b16 %v39
  %v111 = vunpack.c.l.b16 %v40
  %v112 = vunpack.c.h.b16 %v40
  %v113 = vunpack.c.l.b16 %v41
  %v114 = vunpack.c.h.b16 %v41
  %v115 = vunpack.c.l.b16 %v42
  %v116 = vunpack.c.h.b16 %v42
  %v117 = vunpack.c.l.b16 %v43
  %v118 = vunpack.c.h.b16 %v43
  %v119 = vunpack.c.l.b16 %v44
  %v120 = vunpack.c.h.b16 %v44
  %v121 = vpack.c.b16 %v107, %v105
  %v122 = vpack.c.b16 %v108, %v106
  %v123 = vpack.c.b16 %v111, %v109
  %v124 = vpack.c.b16 %v112, %v110
  %v125 = vpack.c.b16 %v115, %v113
  %v126 = vpack.c.b16 %v116, %v114
  %v127 = vpack.c.b16 %v119, %v117
  %v128 = vpack.c.b16 %v120, %v118
  %vm137 = vcmask 523264
  %v139 = vsel %vm137, %v89, 0
  %v142 = vsel %vm137, %v90, 0
  %v145 = vsel %vm137, %v91, 0
  %v148 = vsel %vm137, %v92, 0
  %v151 = vsel %vm137, %v93, 0
  %v154 = vsel %vm137, %v94, 0
  %v157 = vsel %vm137, %v95, 0
  %v160 = vsel %vm137, %v96, 0
  %162 = vmatprep.subr.bf16.mxu0 %v122
  %163 = vmatpush1.bf16.msra.mxu0 %v121
  %164 = vmatprep.subr.bf16.mxu0 %v124
  %165 = vmatpush1.bf16.msra.mxu0 %v123
  %166 = vmatprep.subr.bf16.mxu0 %v126
  %167 = vmatpush1.bf16.msra.mxu0 %v125
  %168 = vmatprep.subr.bf16.mxu0 %v128
  %169 = vmatpush1.bf16.msra.mxu0 %v127
  %170 = vmatprep.subr.bf16.mxu0 0
  %171 = vmatpush1.bf16.msra.mxu0 0
  %172 = vmatprep.subr.bf16.mxu0 0
  %173 = vmatpush1.bf16.msra.mxu0 0
  %174 = vmatprep.subr.bf16.mxu0 0
  %175 = vmatpush1.bf16.msra.mxu0 0
  %176 = vmatprep.subr.bf16.mxu0 0
  %177 = vmatpush1.bf16.msra.mxu0 0
  %178 = vmatprep.subr.bf16.mxu0 0
  %179 = vmatpush1.bf16.msra.mxu0 0
  %180 = vmatprep.subr.bf16.mxu0 0
  %181 = vmatpush1.bf16.msra.mxu0 0
  %182 = vmatprep.subr.bf16.mxu0 0
  %183 = vmatpush1.bf16.msra.mxu0 0
  %184 = vmatprep.subr.bf16.mxu0 0
  %185 = vmatpush1.bf16.msra.mxu0 0
  %186 = vmatprep.subr.bf16.mxu0 0
  %187 = vmatpush1.bf16.msra.mxu0 0
  %188 = vmatprep.subr.bf16.mxu0 0
  %189 = vmatpush1.bf16.msra.mxu0 0
  %190 = vmatprep.subr.bf16.mxu0 0
  %191 = vmatpush1.bf16.msra.mxu0 0
  %192 = vmatprep.subr.bf16.mxu0 0
  %193 = vmatpush1.bf16.msra.mxu0 0
  %194 = vmatprep.mubr.bf16.mxu0 0
  %195 = vmatmul.mubr.bf16.gmra.mrb[0].mxu0 %v139
  %v196 = vpop.f32.mrb[0].mxu0
  %v197 = vadd.f32 %v50, %v196
  %v198 = vpop.f32.mrb[0].mxu0
  %v199 = vadd.f32 %v54, %v198
  %v200 = vpop.f32.mrb[0].mxu0
  %v201 = vadd.f32 %v50, %v200
  %v202 = vpop.f32.mrb[0].mxu0
  %v203 = vadd.f32 %v54, %v202
  %204 = vmatprep.mubr.bf16.mxu0 0
  %205 = vmatmul.mubr.bf16.gmra.mrb[0].mxu0 %v142
  %v206 = vpop.f32.mrb[0].mxu0
  %v207 = vadd.f32 %v50, %v206
  %v208 = vpop.f32.mrb[0].mxu0
  %v209 = vadd.f32 %v54, %v208
  %v210 = vpop.f32.mrb[0].mxu0
  %v211 = vadd.f32 %v50, %v210
  %v212 = vpop.f32.mrb[0].mxu0
  %v213 = vadd.f32 %v54, %v212
  %214 = vmatprep.mubr.bf16.mxu0 0
  %215 = vmatmul.mubr.bf16.gmra.mrb[0].mxu0 %v145
  %v216 = vpop.f32.mrb[0].mxu0
  %v217 = vadd.f32 %v50, %v216
  %v218 = vpop.f32.mrb[0].mxu0
  %v219 = vadd.f32 %v54, %v218
  %v220 = vpop.f32.mrb[0].mxu0
  %v221 = vadd.f32 %v50, %v220
  %v222 = vpop.f32.mrb[0].mxu0
  %v223 = vadd.f32 %v54, %v222
  %224 = vmatprep.mubr.bf16.mxu0 0
  %225 = vmatmul.mubr.bf16.gmra.mrb[0].mxu0 %v148
  %v226 = vpop.f32.mrb[0].mxu0
  %v227 = vadd.f32 %v50, %v226
  %v228 = vpop.f32.mrb[0].mxu0
  %v229 = vadd.f32 %v54, %v228
  %v230 = vpop.f32.mrb[0].mxu0
  %v231 = vadd.f32 %v50, %v230
  %v232 = vpop.f32.mrb[0].mxu0
  %v233 = vadd.f32 %v54, %v232
  %234 = vmatprep.mubr.bf16.mxu0 0
  %235 = vmatmul.mubr.bf16.gmra.mrb[0].mxu0 %v151
  %v236 = vpop.f32.mrb[0].mxu0
  %v237 = vadd.f32 %v50, %v236
  %v238 = vpop.f32.mrb[0].mxu0
  %v239 = vadd.f32 %v54, %v238
  %v240 = vpop.f32.mrb[0].mxu0
  %v241 = vadd.f32 %v50, %v240
  %v242 = vpop.f32.mrb[0].mxu0
  %v243 = vadd.f32 %v54, %v242
  %244 = vmatprep.mubr.bf16.mxu0 0
  %245 = vmatmul.mubr.bf16.gmra.mrb[0].mxu0 %v154
  %v246 = vpop.f32.mrb[0].mxu0
  %v247 = vadd.f32 %v50, %v246
  %v248 = vpop.f32.mrb[0].mxu0
  %v249 = vadd.f32 %v54, %v248
  %v250 = vpop.f32.mrb[0].mxu0
  %v251 = vadd.f32 %v50, %v250
  %v252 = vpop.f32.mrb[0].mxu0
  %v253 = vadd.f32 %v54, %v252
  %254 = vmatprep.mubr.bf16.mxu0 0
  %255 = vmatmul.mubr.bf16.gmra.mrb[0].mxu0 %v157
  %v256 = vpop.f32.mrb[0].mxu0
  %v257 = vadd.f32 %v50, %v256
  %v258 = vpop.f32.mrb[0].mxu0
  %v259 = vadd.f32 %v54, %v258
  %v260 = vpop.f32.mrb[0].mxu0
  %v261 = vadd.f32 %v50, %v260
  %v262 = vpop.f32.mrb[0].mxu0
  %v263 = vadd.f32 %v54, %v262
  %264 = vmatprep.mubr.bf16.mxu0 0
  %265 = vmatmul.mubr.bf16.gmra.mrb[0].mxu0 %v160
  %v266 = vpop.f32.mrb[0].mxu0
  %v267 = vadd.f32 %v50, %v266
  %v268 = vpop.f32.mrb[0].mxu0
  %v269 = vadd.f32 %v54, %v268
  %v270 = vpop.f32.mrb[0].mxu0
  %v271 = vadd.f32 %v50, %v270
  %v272 = vpop.f32.mrb[0].mxu0
  %v273 = vadd.f32 %v54, %v272
  %274 = vdwg.mxu0
  %v275 = vmax.f32 %v197, 0.0
  %v276 = vmax.f32 %v199, 0.0
  %v277 = vmax.f32 %v201, 0.0
  %v278 = vmax.f32 %v203, 0.0
  %v279 = vmax.f32 %v207, 0.0
  %v280 = vmax.f32 %v209, 0.0
  %v281 = vmax.f32 %v211, 0.0
  %v282 = vmax.f32 %v213, 0.0
  %v283 = vmax.f32 %v217, 0.0
  %v284 = vmax.f32 %v219, 0.0
  %v285 = vmax.f32 %v221, 0.0
  %v286 = vmax.f32 %v223, 0.0
  %v287 = vmax.f32 %v227, 0.0
  %v288 = vmax.f32 %v229, 0.0
  %v289 = vmax.f32 %v231, 0.0
  %v290 = vmax.f32 %v233, 0.0
  %v291 = vmax.f32 %v237, 0.0
  %v292 = vmax.f32 %v239, 0.0
  %v293 = vmax.f32 %v241, 0.0
  %v294 = vmax.f32 %v243, 0.0
  %v295 = vmax.f32 %v247, 0.0
  %v296 = vmax.f32 %v249, 0.0
  %v297 = vmax.f32 %v251, 0.0
  %v298 = vmax.f32 %v253, 0.0
  %v299 = vmax.f32 %v257, 0.0
  %v300 = vmax.f32 %v259, 0.0
  %v301 = vmax.f32 %v261, 0.0
  %v302 = vmax.f32 %v263, 0.0
  %v303 = vmax.f32 %v267, 0.0
  %v304 = vmax.f32 %v269, 0.0
  %v305 = vmax.f32 %v271, 0.0
  %v306 = vmax.f32 %v273, 0.0
  %v307 = vpack.c.bf16 %v277, %v275
  %v308 = vpack.c.bf16 %v278, %v276
  %v309 = vpack.c.bf16 %v281, %v279
  %v310 = vpack.c.bf16 %v282, %v280
  %v311 = vpack.c.bf16 %v285, %v283
  %v312 = vpack.c.bf16 %v286, %v284
  %v313 = vpack.c.bf16 %v289, %v287
  %v314 = vpack.c.bf16 %v290, %v288
  %v315 = vpack.c.bf16 %v293, %v291
  %v316 = vpack.c.bf16 %v294, %v292
  %v317 = vpack.c.bf16 %v297, %v295
  %v318 = vpack.c.bf16 %v298, %v296
  %v319 = vpack.c.bf16 %v301, %v299
  %v320 = vpack.c.bf16 %v302, %v300
  %v321 = vpack.c.bf16 %v305, %v303
  %v322 = vpack.c.bf16 %v306, %v304
  %v323 = vld [vmem:[%s3] sm:$0xf]
  %v324 = vld [vmem:[%s3 + $0x4] sm:$0xf]
  %v325 = vld [vmem:[%s3 + $0x8] sm:$0xf]
  %v326 = vld [vmem:[%s3 + $0xc] sm:$0xf]
  %v331 = vunpack.c.l.b16 %v323
  %v332 = vunpack.c.l.b16 %v324
  %v333 = vunpack.c.l.b16 %v325
  %v334 = vunpack.c.l.b16 %v326
  %v335 = vpack.c.b16 %v332, %v331
  %v336 = vpack.c.b16 %v334, %v333
  %vm339 = vcmask 261120
  %v341 = vsel %vm339, %v307, 0
  %v344 = vsel %vm339, %v309, 0
  %v347 = vsel %vm339, %v311, 0
  %v350 = vsel %vm339, %v313, 0
  %v353 = vsel %vm339, %v315, 0
  %v356 = vsel %vm339, %v317, 0
  %v359 = vsel %vm339, %v319, 0
  %v362 = vsel %vm339, %v321, 0
  %364 = vmatprep.subr.bf16.mxu0 0
  %365 = vmatpush1.bf16.msra.mxu0 %v335
  %366 = vmatprep.subr.bf16.mxu0 0
  %367 = vmatpush1.bf16.msra.mxu0 %v336
  %368 = vmatprep.subr.bf16.mxu0 0
  %369 = vmatpush1.bf16.msra.mxu0 0
  %370 = vmatprep.subr.bf16.mxu0 0
  %371 = vmatpush1.bf16.msra.mxu0 0
  %372 = vmatprep.subr.bf16.mxu0 0
  %373 = vmatpush1.bf16.msra.mxu0 0
  %374 = vmatprep.subr.bf16.mxu0 0
  %375 = vmatpush1.bf16.msra.mxu0 0
  %376 = vmatprep.subr.bf16.mxu0 0
  %377 = vmatpush1.bf16.msra.mxu0 0
  %378 = vmatprep.subr.bf16.mxu0 0
  %379 = vmatpush1.bf16.msra.mxu0 0
  %380 = vmatprep.subr.bf16.mxu0 0
  %381 = vmatpush1.bf16.msra.mxu0 0
  %382 = vmatprep.subr.bf16.mxu0 0
  %383 = vmatpush1.bf16.msra.mxu0 0
  %384 = vmatprep.subr.bf16.mxu0 0
  %385 = vmatpush1.bf16.msra.mxu0 0
  %386 = vmatprep.subr.bf16.mxu0 0
  %387 = vmatpush1.bf16.msra.mxu0 0
  %388 = vmatprep.subr.bf16.mxu0 0
  %389 = vmatpush1.bf16.msra.mxu0 0
  %390 = vmatprep.subr.bf16.mxu0 0
  %391 = vmatpush1.bf16.msra.mxu0 0
  %392 = vmatprep.subr.bf16.mxu0 0
  %393 = vmatpush1.bf16.msra.mxu0 0
  %394 = vmatprep.subr.bf16.mxu0 0
  %395 = vmatpush1.bf16.msra.mxu0 0
  %396 = vmatprep.mubr.bf16.mxu0 0
  %397 = vmatmul.mubr.bf16.gmra.mrb[0].mxu0 %v341
  %v398 = vpop.f32.mrb[0].mxu0
  %v399 = vadd.f32 0.0, %v398
  %v400 = vpop.f32.mrb[0].mxu0
  %v401 = vpop.f32.mrb[0].mxu0
  %v402 = vadd.f32 0.0, %v401
  %v403 = vpop.f32.mrb[0].mxu0
  %404 = vmatprep.mubr.bf16.mxu0 0
  %405 = vmatmul.mubr.bf16.gmra.mrb[0].mxu0 %v344
  %v406 = vpop.f32.mrb[0].mxu0
  %v407 = vadd.f32 0.0, %v406
  %v408 = vpop.f32.mrb[0].mxu0
  %v409 = vpop.f32.mrb[0].mxu0
  %v410 = vadd.f32 0.0, %v409
  %v411 = vpop.f32.mrb[0].mxu0
  %412 = vmatprep.mubr.bf16.mxu0 0
  %413 = vmatmul.mubr.bf16.gmra.mrb[0].mxu0 %v347
  %v414 = vpop.f32.mrb[0].mxu0
  %v415 = vadd.f32 0.0, %v414
  %v416 = vpop.f32.mrb[0].mxu0
  %v417 = vpop.f32.mrb[0].mxu0
  %v418 = vadd.f32 0.0, %v417
  %v419 = vpop.f32.mrb[0].mxu0
  %420 = vmatprep.mubr.bf16.mxu0 0
  %421 = vmatmul.mubr.bf16.gmra.mrb[0].mxu0 %v350
  %v422 = vpop.f32.mrb[0].mxu0
  %v423 = vadd.f32 0.0, %v422
  %v424 = vpop.f32.mrb[0].mxu0
  %v425 = vpop.f32.mrb[0].mxu0
  %v426 = vadd.f32 0.0, %v425
  %v427 = vpop.f32.mrb[0].mxu0
  %428 = vmatprep.mubr.bf16.mxu0 0
  %429 = vmatmul.mubr.bf16.gmra.mrb[0].mxu0 %v353
  %v430 = vpop.f32.mrb[0].mxu0
  %v431 = vadd.f32 0.0, %v430
  %v432 = vpop.f32.mrb[0].mxu0
  %v433 = vpop.f32.mrb[0].mxu0
  %v434 = vadd.f32 0.0, %v433
  %v435 = vpop.f32.mrb[0].mxu0
  %436 = vmatprep.mubr.bf16.mxu0 0
  %437 = vmatmul.mubr.bf16.gmra.mrb[0].mxu0 %v356
  %v438 = vpop.f32.mrb[0].mxu0
  %v439 = vadd.f32 0.0, %v438
  %v440 = vpop.f32.mrb[0].mxu0
  %v441 = vpop.f32.mrb[0].mxu0
  %v442 = vadd.f32 0.0, %v441
  %v443 = vpop.f32.mrb[0].mxu0
  %444 = vmatprep.mubr.bf16.mxu0 0
  %445 = vmatmul.mubr.bf16.gmra.mrb[0].mxu0 %v359
  %v446 = vpop.f32.mrb[0].mxu0
  %v447 = vadd.f32 0.0, %v446
  %v448 = vpop.f32.mrb[0].mxu0
  %v449 = vpop.f32.mrb[0].mxu0
  %v450 = vadd.f32 0.0, %v449
  %v451 = vpop.f32.mrb[0].mxu0
  %452 = vmatprep.mubr.bf16.mxu0 0
  %453 = vmatmul.mubr.bf16.gmra.mrb[0].mxu0 %v362
  %v454 = vpop.f32.mrb[0].mxu0
  %v455 = vadd.f32 0.0, %v454
  %v456 = vpop.f32.mrb[0].mxu0
  %v457 = vpop.f32.mrb[0].mxu0
  %v458 = vadd.f32 0.0, %v457
  %v459 = vpop.f32.mrb[0].mxu0
  %460 = vdwg.mxu0
  %s461 = scalar_lea.vmem %s3, 16
  %v462 = vld [vmem:[%s461] sm:$0xf]
  %v463 = vld [vmem:[%s461 + $0x4] sm:$0xf]
  %v464 = vld [vmem:[%s461 + $0x8] sm:$0xf]
  %v465 = vld [vmem:[%s461 + $0xc] sm:$0xf]
  %474 = vrot.lane.b32.xlu0 %v307, 96
  %v475 = vpop.permute.xlu0 %474
  %476 = vrot.lane.b32.xlu0 %v309, 96
  %v477 = vpop.permute.xlu0 %476
  %478 = vrot.lane.b32.xlu0 %v311, 96
  %v479 = vpop.permute.xlu0 %478
  %480 = vrot.lane.b32.xlu0 %v313, 96
  %v481 = vpop.permute.xlu0 %480
  %482 = vrot.lane.b32.xlu0 %v315, 96
  %v483 = vpop.permute.xlu0 %482
  %484 = vrot.lane.b32.xlu0 %v317, 96
  %v485 = vpop.permute.xlu0 %484
  %486 = vrot.lane.b32.xlu0 %v319, 96
  %v487 = vpop.permute.xlu0 %486
  %488 = vrot.lane.b32.xlu0 %v321, 96
  %v489 = vpop.permute.xlu0 %488
  %v494 = vunpack.c.l.b16 %v462
  %v495 = vunpack.c.l.b16 %v463
  %v496 = vunpack.c.l.b16 %v464
  %v497 = vunpack.c.l.b16 %v465
  %v498 = vpack.c.b16 %v495, %v494
  %v499 = vpack.c.b16 %v497, %v496
  %v503 = vsel %vm339, %v475, 0
  %v506 = vsel %vm339, %v477, 0
  %v509 = vsel %vm339, %v479, 0
  %v512 = vsel %vm339, %v481, 0
  %v515 = vsel %vm339, %v483, 0
  %v518 = vsel %vm339, %v485, 0
  %v521 = vsel %vm339, %v487, 0
  %v524 = vsel %vm339, %v489, 0
  %526 = vmatprep.subr.bf16.mxu0 0
  %527 = vmatpush1.bf16.msra.mxu0 %v498
  %528 = vmatprep.subr.bf16.mxu0 0
  %529 = vmatpush1.bf16.msra.mxu0 %v499
  %530 = vmatprep.subr.bf16.mxu0 0
  %531 = vmatpush1.bf16.msra.mxu0 0
  %532 = vmatprep.subr.bf16.mxu0 0
  %533 = vmatpush1.bf16.msra.mxu0 0
  %534 = vmatprep.subr.bf16.mxu0 0
  %535 = vmatpush1.bf16.msra.mxu0 0
  %536 = vmatprep.subr.bf16.mxu0 0
  %537 = vmatpush1.bf16.msra.mxu0 0
  %538 = vmatprep.subr.bf16.mxu0 0
  %539 = vmatpush1.bf16.msra.mxu0 0
  %540 = vmatprep.subr.bf16.mxu0 0
  %541 = vmatpush1.bf16.msra.mxu0 0
  %542 = vmatprep.subr.bf16.mxu0 0
  %543 = vmatpush1.bf16.msra.mxu0 0
  %544 = vmatprep.subr.bf16.mxu0 0
  %545 = vmatpush1.bf16.msra.mxu0 0
  %546 = vmatprep.subr.bf16.mxu0 0
  %547 = vmatpush1.bf16.msra.mxu0 0
  %548 = vmatprep.subr.bf16.mxu0 0
  %549 = vmatpush1.bf16.msra.mxu0 0
  %550 = vmatprep.subr.bf16.mxu0 0
  %551 = vmatpush1.bf16.msra.mxu0 0
  %552 = vmatprep.subr.bf16.mxu0 0
  %553 = vmatpush1.bf16.msra.mxu0 0
  %554 = vmatprep.subr.bf16.mxu0 0
  %555 = vmatpush1.bf16.msra.mxu0 0
  %556 = vmatprep.subr.bf16.mxu0 0
  %557 = vmatpush1.bf16.msra.mxu0 0
  %558 = vmatprep.mubr.bf16.mxu0 0
  %559 = vmatmul.mubr.bf16.gmra.mrb[0].mxu0 %v503
  %v560 = vpop.f32.mrb[0].mxu0
  %v561 = vadd.f32 0.0, %v560
  %v562 = vpop.f32.mrb[0].mxu0
  %v563 = vpop.f32.mrb[0].mxu0
  %v564 = vadd.f32 0.0, %v563
  %v565 = vpop.f32.mrb[0].mxu0
  %566 = vmatprep.mubr.bf16.mxu0 0
  %567 = vmatmul.mubr.bf16.gmra.mrb[0].mxu0 %v506
  %v568 = vpop.f32.mrb[0].mxu0
  %v569 = vadd.f32 0.0, %v568
  %v570 = vpop.f32.mrb[0].mxu0
  %v571 = vpop.f32.mrb[0].mxu0
  %v572 = vadd.f32 0.0, %v571
  %v573 = vpop.f32.mrb[0].mxu0
  %574 = vmatprep.mubr.bf16.mxu0 0
  %575 = vmatmul.mubr.bf16.gmra.mrb[0].mxu0 %v509
  %v576 = vpop.f32.mrb[0].mxu0
  %v577 = vadd.f32 0.0, %v576
  %v578 = vpop.f32.mrb[0].mxu0
  %v579 = vpop.f32.mrb[0].mxu0
  %v580 = vadd.f32 0.0, %v579
  %v581 = vpop.f32.mrb[0].mxu0
  %582 = vmatprep.mubr.bf16.mxu0 0
  %583 = vmatmul.mubr.bf16.gmra.mrb[0].mxu0 %v512
  %v584 = vpop.f32.mrb[0].mxu0
  %v585 = vadd.f32 0.0, %v584
  %v586 = vpop.f32.mrb[0].mxu0
  %v587 = vpop.f32.mrb[0].mxu0
  %v588 = vadd.f32 0.0, %v587
  %v589 = vpop.f32.mrb[0].mxu0
  %590 = vmatprep.mubr.bf16.mxu0 0
  %591 = vmatmul.mubr.bf16.gmra.mrb[0].mxu0 %v515
  %v592 = vpop.f32.mrb[0].mxu0
  %v593 = vadd.f32 0.0, %v592
  %v594 = vpop.f32.mrb[0].mxu0
  %v595 = vpop.f32.mrb[0].mxu0
  %v596 = vadd.f32 0.0, %v595
  %v597 = vpop.f32.mrb[0].mxu0
  %598 = vmatprep.mubr.bf16.mxu0 0
  %599 = vmatmul.mubr.bf16.gmra.mrb[0].mxu0 %v518
  %v600 = vpop.f32.mrb[0].mxu0
  %v601 = vadd.f32 0.0, %v600
  %v602 = vpop.f32.mrb[0].mxu0
  %v603 = vpop.f32.mrb[0].mxu0
  %v604 = vadd.f32 0.0, %v603
  %v605 = vpop.f32.mrb[0].mxu0
  %606 = vmatprep.mubr.bf16.mxu0 0
  %607 = vmatmul.mubr.bf16.gmra.mrb[0].mxu0 %v521
  %v608 = vpop.f32.mrb[0].mxu0
  %v609 = vadd.f32 0.0, %v608
  %v610 = vpop.f32.mrb[0].mxu0
  %v611 = vpop.f32.mrb[0].mxu0
  %v612 = vadd.f32 0.0, %v611
  %v613 = vpop.f32.mrb[0].mxu0
  %614 = vmatprep.mubr.bf16.mxu0 0
  %615 = vmatmul.mubr.bf16.gmra.mrb[0].mxu0 %v524
  %v616 = vpop.f32.mrb[0].mxu0
  %v617 = vadd.f32 0.0, %v616
  %v618 = vpop.f32.mrb[0].mxu0
  %v619 = vpop.f32.mrb[0].mxu0
  %v620 = vadd.f32 0.0, %v619
  %v621 = vpop.f32.mrb[0].mxu0
  %622 = vdwg.mxu0
  %s623 = scalar_lea.vmem %s3, 32
  %v624 = vld [vmem:[%s623] sm:$0xf]
  %v625 = vld [vmem:[%s623 + $0x4] sm:$0xf]
  %v626 = vld [vmem:[%s623 + $0x8] sm:$0xf]
  %v627 = vld [vmem:[%s623 + $0xc] sm:$0xf]
  %628 = vrot.lane.b32.xlu0 %v307, 64
  %v629 = vpop.permute.xlu0 %628
  %630 = vrot.lane.b32.xlu0 %v309, 64
  %v631 = vpop.permute.xlu0 %630
  %632 = vrot.lane.b32.xlu0 %v311, 64
  %v633 = vpop.permute.xlu0 %632
  %634 = vrot.lane.b32.xlu0 %v313, 64
  %v635 = vpop.permute.xlu0 %634
  %636 = vrot.lane.b32.xlu0 %v315, 64
  %v637 = vpop.permute.xlu0 %636
  %638 = vrot.lane.b32.xlu0 %v317, 64
  %v639 = vpop.permute.xlu0 %638
  %640 = vrot.lane.b32.xlu0 %v319, 64
  %v641 = vpop.permute.xlu0 %640
  %642 = vrot.lane.b32.xlu0 %v321, 64
  %v643 = vpop.permute.xlu0 %642
  %v648 = vunpack.c.l.b16 %v624
  %v649 = vunpack.c.l.b16 %v625
  %v650 = vunpack.c.l.b16 %v626
  %v651 = vunpack.c.l.b16 %v627
  %v652 = vpack.c.b16 %v649, %v648
  %v653 = vpack.c.b16 %v651, %v650
  %v657 = vsel %vm339, %v629, 0
  %v660 = vsel %vm339, %v631, 0
  %v663 = vsel %vm339, %v633, 0
  %v666 = vsel %vm339, %v635, 0
  %v669 = vsel %vm339, %v637, 0
  %v672 = vsel %vm339, %v639, 0
  %v675 = vsel %vm339, %v641, 0
  %v678 = vsel %vm339, %v643, 0
  %680 = vmatprep.subr.bf16.mxu0 0
  %681 = vmatpush1.bf16.msra.mxu0 %v652
  %682 = vmatprep.subr.bf16.mxu0 0
  %683 = vmatpush1.bf16.msra.mxu0 %v653
  %684 = vmatprep.subr.bf16.mxu0 0
  %685 = vmatpush1.bf16.msra.mxu0 0
  %686 = vmatprep.subr.bf16.mxu0 0
  %687 = vmatpush1.bf16.msra.mxu0 0
  %688 = vmatprep.subr.bf16.mxu0 0
  %689 = vmatpush1.bf16.msra.mxu0 0
  %690 = vmatprep.subr.bf16.mxu0 0
  %691 = vmatpush1.bf16.msra.mxu0 0
  %692 = vmatprep.subr.bf16.mxu0 0
  %693 = vmatpush1.bf16.msra.mxu0 0
  %694 = vmatprep.subr.bf16.mxu0 0
  %695 = vmatpush1.bf16.msra.mxu0 0
  %696 = vmatprep.subr.bf16.mxu0 0
  %697 = vmatpush1.bf16.msra.mxu0 0
  %698 = vmatprep.subr.bf16.mxu0 0
  %699 = vmatpush1.bf16.msra.mxu0 0
  %700 = vmatprep.subr.bf16.mxu0 0
  %701 = vmatpush1.bf16.msra.mxu0 0
  %702 = vmatprep.subr.bf16.mxu0 0
  %703 = vmatpush1.bf16.msra.mxu0 0
  %704 = vmatprep.subr.bf16.mxu0 0
  %705 = vmatpush1.bf16.msra.mxu0 0
  %706 = vmatprep.subr.bf16.mxu0 0
  %707 = vmatpush1.bf16.msra.mxu0 0
  %708 = vmatprep.subr.bf16.mxu0 0
  %709 = vmatpush1.bf16.msra.mxu0 0
  %710 = vmatprep.subr.bf16.mxu0 0
  %711 = vmatpush1.bf16.msra.mxu0 0
  %712 = vmatprep.mubr.bf16.mxu0 0
  %713 = vmatmul.mubr.bf16.gmra.mrb[0].mxu0 %v657
  %v714 = vpop.f32.mrb[0].mxu0
  %v715 = vadd.f32 0.0, %v714
  %v716 = vpop.f32.mrb[0].mxu0
  %v717 = vpop.f32.mrb[0].mxu0
  %v718 = vadd.f32 0.0, %v717
  %v719 = vpop.f32.mrb[0].mxu0
  %720 = vmatprep.mubr.bf16.mxu0 0
  %721 = vmatmul.mubr.bf16.gmra.mrb[0].mxu0 %v660
  %v722 = vpop.f32.mrb[0].mxu0
  %v723 = vadd.f32 0.0, %v722
  %v724 = vpop.f32.mrb[0].mxu0
  %v725 = vpop.f32.mrb[0].mxu0
  %v726 = vadd.f32 0.0, %v725
  %v727 = vpop.f32.mrb[0].mxu0
  %728 = vmatprep.mubr.bf16.mxu0 0
  %729 = vmatmul.mubr.bf16.gmra.mrb[0].mxu0 %v663
  %v730 = vpop.f32.mrb[0].mxu0
  %v731 = vadd.f32 0.0, %v730
  %v732 = vpop.f32.mrb[0].mxu0
  %v733 = vpop.f32.mrb[0].mxu0
  %v734 = vadd.f32 0.0, %v733
  %v735 = vpop.f32.mrb[0].mxu0
  %736 = vmatprep.mubr.bf16.mxu0 0
  %737 = vmatmul.mubr.bf16.gmra.mrb[0].mxu0 %v666
  %v738 = vpop.f32.mrb[0].mxu0
  %v739 = vadd.f32 0.0, %v738
  %v740 = vpop.f32.mrb[0].mxu0
  %v741 = vpop.f32.mrb[0].mxu0
  %v742 = vadd.f32 0.0, %v741
  %v743 = vpop.f32.mrb[0].mxu0
  %744 = vmatprep.mubr.bf16.mxu0 0
  %745 = vmatmul.mubr.bf16.gmra.mrb[0].mxu0 %v669
  %v746 = vpop.f32.mrb[0].mxu0
  %v747 = vadd.f32 0.0, %v746
  %v748 = vpop.f32.mrb[0].mxu0
  %v749 = vpop.f32.mrb[0].mxu0
  %v750 = vadd.f32 0.0, %v749
  %v751 = vpop.f32.mrb[0].mxu0
  %752 = vmatprep.mubr.bf16.mxu0 0
  %753 = vmatmul.mubr.bf16.gmra.mrb[0].mxu0 %v672
  %v754 = vpop.f32.mrb[0].mxu0
  %v755 = vadd.f32 0.0, %v754
  %v756 = vpop.f32.mrb[0].mxu0
  %v757 = vpop.f32.mrb[0].mxu0
  %v758 = vadd.f32 0.0, %v757
  %v759 = vpop.f32.mrb[0].mxu0
  %760 = vmatprep.mubr.bf16.mxu0 0
  %761 = vmatmul.mubr.bf16.gmra.mrb[0].mxu0 %v675
  %v762 = vpop.f32.mrb[0].mxu0
  %v763 = vadd.f32 0.0, %v762
  %v764 = vpop.f32.mrb[0].mxu0
  %v765 = vpop.f32.mrb[0].mxu0
  %v766 = vadd.f32 0.0, %v765
  %v767 = vpop.f32.mrb[0].mxu0
  %768 = vmatprep.mubr.bf16.mxu0 0
  %769 = vmatmul.mubr.bf16.gmra.mrb[0].mxu0 %v678
  %v770 = vpop.f32.mrb[0].mxu0
  %v771 = vadd.f32 0.0, %v770
  %v772 = vpop.f32.mrb[0].mxu0
  %v773 = vpop.f32.mrb[0].mxu0
  %v774 = vadd.f32 0.0, %v773
  %v775 = vpop.f32.mrb[0].mxu0
  %776 = vdwg.mxu0
  %s777 = scalar_lea.vmem %s3, 48
  %v778 = vld [vmem:[%s777] sm:$0xf]
  %v779 = vld [vmem:[%s777 + $0x4] sm:$0xf]
  %v780 = vld [vmem:[%s777 + $0x8] sm:$0xf]
  %v781 = vld [vmem:[%s777 + $0xc] sm:$0xf]
  %782 = vrot.lane.b32.xlu0 %v307, 32
  %v783 = vpop.permute.xlu0 %782
  %784 = vrot.lane.b32.xlu0 %v309, 32
  %v785 = vpop.permute.xlu0 %784
  %786 = vrot.lane.b32.xlu0 %v311, 32
  %v787 = vpop.permute.xlu0 %786
  %788 = vrot.lane.b32.xlu0 %v313, 32
  %v789 = vpop.permute.xlu0 %788
  %790 = vrot.lane.b32.xlu0 %v315, 32
  %v791 = vpop.permute.xlu0 %790
  %792 = vrot.lane.b32.xlu0 %v317, 32
  %v793 = vpop.permute.xlu0 %792
  %794 = vrot.lane.b32.xlu0 %v319, 32
  %v795 = vpop.permute.xlu0 %794
  %796 = vrot.lane.b32.xlu0 %v321, 32
  %v797 = vpop.permute.xlu0 %796
  %v802 = vunpack.c.l.b16 %v778
  %v803 = vunpack.c.l.b16 %v779
  %v804 = vunpack.c.l.b16 %v780
  %v805 = vunpack.c.l.b16 %v781
  %v806 = vpack.c.b16 %v803, %v802
  %v807 = vpack.c.b16 %v805, %v804
  %v811 = vsel %vm339, %v783, 0
  %v814 = vsel %vm339, %v785, 0
  %v817 = vsel %vm339, %v787, 0
  %v820 = vsel %vm339, %v789, 0
  %v823 = vsel %vm339, %v791, 0
  %v826 = vsel %vm339, %v793, 0
  %v829 = vsel %vm339, %v795, 0
  %v832 = vsel %vm339, %v797, 0
  %834 = vmatprep.subr.bf16.mxu0 0
  %835 = vmatpush1.bf16.msra.mxu0 %v806
  %836 = vmatprep.subr.bf16.mxu0 0
  %837 = vmatpush1.bf16.msra.mxu0 %v807
  %838 = vmatprep.subr.bf16.mxu0 0
  %839 = vmatpush1.bf16.msra.mxu0 0
  %840 = vmatprep.subr.bf16.mxu0 0
  %841 = vmatpush1.bf16.msra.mxu0 0
  %842 = vmatprep.subr.bf16.mxu0 0
  %843 = vmatpush1.bf16.msra.mxu0 0
  %844 = vmatprep.subr.bf16.mxu0 0
  %845 = vmatpush1.bf16.msra.mxu0 0
  %846 = vmatprep.subr.bf16.mxu0 0
  %847 = vmatpush1.bf16.msra.mxu0 0
  %848 = vmatprep.subr.bf16.mxu0 0
  %849 = vmatpush1.bf16.msra.mxu0 0
  %850 = vmatprep.subr.bf16.mxu0 0
  %851 = vmatpush1.bf16.msra.mxu0 0
  %852 = vmatprep.subr.bf16.mxu0 0
  %853 = vmatpush1.bf16.msra.mxu0 0
  %854 = vmatprep.subr.bf16.mxu0 0
  %855 = vmatpush1.bf16.msra.mxu0 0
  %856 = vmatprep.subr.bf16.mxu0 0
  %857 = vmatpush1.bf16.msra.mxu0 0
  %858 = vmatprep.subr.bf16.mxu0 0
  %859 = vmatpush1.bf16.msra.mxu0 0
  %860 = vmatprep.subr.bf16.mxu0 0
  %861 = vmatpush1.bf16.msra.mxu0 0
  %862 = vmatprep.subr.bf16.mxu0 0
  %863 = vmatpush1.bf16.msra.mxu0 0
  %864 = vmatprep.subr.bf16.mxu0 0
  %865 = vmatpush1.bf16.msra.mxu0 0
  %866 = vmatprep.mubr.bf16.mxu0 0
  %867 = vmatmul.mubr.bf16.gmra.mrb[0].mxu0 %v811
  %v868 = vpop.f32.mrb[0].mxu0
  %v869 = vadd.f32 0.0, %v868
  %v870 = vpop.f32.mrb[0].mxu0
  %v871 = vpop.f32.mrb[0].mxu0
  %v872 = vadd.f32 0.0, %v871
  %v873 = vpop.f32.mrb[0].mxu0
  %874 = vmatprep.mubr.bf16.mxu0 0
  %875 = vmatmul.mubr.bf16.gmra.mrb[0].mxu0 %v814
  %v876 = vpop.f32.mrb[0].mxu0
  %v877 = vadd.f32 0.0, %v876
  %v878 = vpop.f32.mrb[0].mxu0
  %v879 = vpop.f32.mrb[0].mxu0
  %v880 = vadd.f32 0.0, %v879
  %v881 = vpop.f32.mrb[0].mxu0
  %882 = vmatprep.mubr.bf16.mxu0 0
  %883 = vmatmul.mubr.bf16.gmra.mrb[0].mxu0 %v817
  %v884 = vpop.f32.mrb[0].mxu0
  %v885 = vadd.f32 0.0, %v884
  %v886 = vpop.f32.mrb[0].mxu0
  %v887 = vpop.f32.mrb[0].mxu0
  %v888 = vadd.f32 0.0, %v887
  %v889 = vpop.f32.mrb[0].mxu0
  %890 = vmatprep.mubr.bf16.mxu0 0
  %891 = vmatmul.mubr.bf16.gmra.mrb[0].mxu0 %v820
  %v892 = vpop.f32.mrb[0].mxu0
  %v893 = vadd.f32 0.0, %v892
  %v894 = vpop.f32.mrb[0].mxu0
  %v895 = vpop.f32.mrb[0].mxu0
  %v896 = vadd.f32 0.0, %v895
  %v897 = vpop.f32.mrb[0].mxu0
  %898 = vmatprep.mubr.bf16.mxu0 0
  %899 = vmatmul.mubr.bf16.gmra.mrb[0].mxu0 %v823
  %v900 = vpop.f32.mrb[0].mxu0
  %v901 = vadd.f32 0.0, %v900
  %v902 = vpop.f32.mrb[0].mxu0
  %v903 = vpop.f32.mrb[0].mxu0
  %v904 = vadd.f32 0.0, %v903
  %v905 = vpop.f32.mrb[0].mxu0
  %906 = vmatprep.mubr.bf16.mxu0 0
  %907 = vmatmul.mubr.bf16.gmra.mrb[0].mxu0 %v826
  %v908 = vpop.f32.mrb[0].mxu0
  %v909 = vadd.f32 0.0, %v908
  %v910 = vpop.f32.mrb[0].mxu0
  %v911 = vpop.f32.mrb[0].mxu0
  %v912 = vadd.f32 0.0, %v911
  %v913 = vpop.f32.mrb[0].mxu0
  %914 = vmatprep.mubr.bf16.mxu0 0
  %915 = vmatmul.mubr.bf16.gmra.mrb[0].mxu0 %v829
  %v916 = vpop.f32.mrb[0].mxu0
  %v917 = vadd.f32 0.0, %v916
  %v918 = vpop.f32.mrb[0].mxu0
  %v919 = vpop.f32.mrb[0].mxu0
  %v920 = vadd.f32 0.0, %v919
  %v921 = vpop.f32.mrb[0].mxu0
  %922 = vmatprep.mubr.bf16.mxu0 0
  %923 = vmatmul.mubr.bf16.gmra.mrb[0].mxu0 %v832
  %v924 = vpop.f32.mrb[0].mxu0
  %v925 = vadd.f32 0.0, %v924
  %v926 = vpop.f32.mrb[0].mxu0
  %v927 = vpop.f32.mrb[0].mxu0
  %v928 = vadd.f32 0.0, %v927
  %v929 = vpop.f32.mrb[0].mxu0
  %930 = vdwg.mxu0
  %s931 = scalar_lea.vmem %s3, 64
  %v932 = vld [vmem:[%s931] sm:$0xf]
  %v933 = vld [vmem:[%s931 + $0x4] sm:$0xf]
  %v934 = vld [vmem:[%s931 + $0x8] sm:$0xf]
  %v935 = vld [vmem:[%s931 + $0xc] sm:$0xf]
  %v940 = vunpack.c.l.b16 %v932
  %v941 = vunpack.c.l.b16 %v933
  %v942 = vunpack.c.l.b16 %v934
  %v943 = vunpack.c.l.b16 %v935
  %v944 = vpack.c.b16 %v941, %v940
  %v945 = vpack.c.b16 %v943, %v942
  %v949 = vsel %vm339, %v308, 0
  %v952 = vsel %vm339, %v310, 0
  %v955 = vsel %vm339, %v312, 0
  %v958 = vsel %vm339, %v314, 0
  %v961 = vsel %vm339, %v316, 0
  %v964 = vsel %vm339, %v318, 0
  %v967 = vsel %vm339, %v320, 0
  %v970 = vsel %vm339, %v322, 0
  %972 = vmatprep.subr.bf16.mxu0 0
  %973 = vmatpush1.bf16.msra.mxu0 %v944
  %974 = vmatprep.subr.bf16.mxu0 0
  %975 = vmatpush1.bf16.msra.mxu0 %v945
  %976 = vmatprep.subr.bf16.mxu0 0
  %977 = vmatpush1.bf16.msra.mxu0 0
  %978 = vmatprep.subr.bf16.mxu0 0
  %979 = vmatpush1.bf16.msra.mxu0 0
  %980 = vmatprep.subr.bf16.mxu0 0
  %981 = vmatpush1.bf16.msra.mxu0 0
  %982 = vmatprep.subr.bf16.mxu0 0
  %983 = vmatpush1.bf16.msra.mxu0 0
  %984 = vmatprep.subr.bf16.mxu0 0
  %985 = vmatpush1.bf16.msra.mxu0 0
  %986 = vmatprep.subr.bf16.mxu0 0
  %987 = vmatpush1.bf16.msra.mxu0 0
  %988 = vmatprep.subr.bf16.mxu0 0
  %989 = vmatpush1.bf16.msra.mxu0 0
  %990 = vmatprep.subr.bf16.mxu0 0
  %991 = vmatpush1.bf16.msra.mxu0 0
  %992 = vmatprep.subr.bf16.mxu0 0
  %993 = vmatpush1.bf16.msra.mxu0 0
  %994 = vmatprep.subr.bf16.mxu0 0
  %995 = vmatpush1.bf16.msra.mxu0 0
  %996 = vmatprep.subr.bf16.mxu0 0
  %997 = vmatpush1.bf16.msra.mxu0 0
  %998 = vmatprep.subr.bf16.mxu0 0
  %999 = vmatpush1.bf16.msra.mxu0 0
  %1000 = vmatprep.subr.bf16.mxu0 0
  %1001 = vmatpush1.bf16.msra.mxu0 0
  %1002 = vmatprep.subr.bf16.mxu0 0
  %1003 = vmatpush1.bf16.msra.mxu0 0
  %1004 = vmatprep.mubr.bf16.mxu0 0
  %1005 = vmatmul.mubr.bf16.gmra.mrb[0].mxu0 %v949
  %v1006 = vpop.f32.mrb[0].mxu0
  %v1007 = vadd.f32 0.0, %v1006
  %v1008 = vpop.f32.mrb[0].mxu0
  %v1009 = vpop.f32.mrb[0].mxu0
  %v1010 = vadd.f32 0.0, %v1009
  %v1011 = vpop.f32.mrb[0].mxu0
  %1012 = vmatprep.mubr.bf16.mxu0 0
  %1013 = vmatmul.mubr.bf16.gmra.mrb[0].mxu0 %v952
  %v1014 = vpop.f32.mrb[0].mxu0
  %v1015 = vadd.f32 0.0, %v1014
  %v1016 = vpop.f32.mrb[0].mxu0
  %v1017 = vpop.f32.mrb[0].mxu0
  %v1018 = vadd.f32 0.0, %v1017
  %v1019 = vpop.f32.mrb[0].mxu0
  %1020 = vmatprep.mubr.bf16.mxu0 0
  %1021 = vmatmul.mubr.bf16.gmra.mrb[0].mxu0 %v955
  %v1022 = vpop.f32.mrb[0].mxu0
  %v1023 = vadd.f32 0.0, %v1022
  %v1024 = vpop.f32.mrb[0].mxu0
  %v1025 = vpop.f32.mrb[0].mxu0
  %v1026 = vadd.f32 0.0, %v1025
  %v1027 = vpop.f32.mrb[0].mxu0
  %1028 = vmatprep.mubr.bf16.mxu0 0
  %1029 = vmatmul.mubr.bf16.gmra.mrb[0].mxu0 %v958
  %v1030 = vpop.f32.mrb[0].mxu0
  %v1031 = vadd.f32 0.0, %v1030
  %v1032 = vpop.f32.mrb[0].mxu0
  %v1033 = vpop.f32.mrb[0].mxu0
  %v1034 = vadd.f32 0.0, %v1033
  %v1035 = vpop.f32.mrb[0].mxu0
  %1036 = vmatprep.mubr.bf16.mxu0 0
  %1037 = vmatmul.mubr.bf16.gmra.mrb[0].mxu0 %v961
  %v1038 = vpop.f32.mrb[0].mxu0
  %v1039 = vadd.f32 0.0, %v1038
  %v1040 = vpop.f32.mrb[0].mxu0
  %v1041 = vpop.f32.mrb[0].mxu0
  %v1042 = vadd.f32 0.0, %v1041
  %v1043 = vpop.f32.mrb[0].mxu0
  %1044 = vmatprep.mubr.bf16.mxu0 0
  %1045 = vmatmul.mubr.bf16.gmra.mrb[0].mxu0 %v964
  %v1046 = vpop.f32.mrb[0].mxu0
  %v1047 = vadd.f32 0.0, %v1046
  %v1048 = vpop.f32.mrb[0].mxu0
  %v1049 = vpop.f32.mrb[0].mxu0
  %v1050 = vadd.f32 0.0, %v1049
  %v1051 = vpop.f32.mrb[0].mxu0
  %1052 = vmatprep.mubr.bf16.mxu0 0
  %1053 = vmatmul.mubr.bf16.gmra.mrb[0].mxu0 %v967
  %v1054 = vpop.f32.mrb[0].mxu0
  %v1055 = vadd.f32 0.0, %v1054
  %v1056 = vpop.f32.mrb[0].mxu0
  %v1057 = vpop.f32.mrb[0].mxu0
  %v1058 = vadd.f32 0.0, %v1057
  %v1059 = vpop.f32.mrb[0].mxu0
  %1060 = vmatprep.mubr.bf16.mxu0 0
  %1061 = vmatmul.mubr.bf16.gmra.mrb[0].mxu0 %v970
  %v1062 = vpop.f32.mrb[0].mxu0
  %v1063 = vadd.f32 0.0, %v1062
  %v1064 = vpop.f32.mrb[0].mxu0
  %v1065 = vpop.f32.mrb[0].mxu0
  %v1066 = vadd.f32 0.0, %v1065
  %v1067 = vpop.f32.mrb[0].mxu0
  %1068 = vdwg.mxu0
  %s1069 = scalar_lea.vmem %s3, 80
  %v1070 = vld [vmem:[%s1069] sm:$0xf]
  %v1071 = vld [vmem:[%s1069 + $0x4] sm:$0xf]
  %v1072 = vld [vmem:[%s1069 + $0x8] sm:$0xf]
  %v1073 = vld [vmem:[%s1069 + $0xc] sm:$0xf]
  %1082 = vrot.lane.b32.xlu0 %v308, 96
  %v1083 = vpop.permute.xlu0 %1082
  %1084 = vrot.lane.b32.xlu0 %v310, 96
  %v1085 = vpop.permute.xlu0 %1084
  %1086 = vrot.lane.b32.xlu0 %v312, 96
  %v1087 = vpop.permute.xlu0 %1086
  %1088 = vrot.lane.b32.xlu0 %v314, 96
  %v1089 = vpop.permute.xlu0 %1088
  %1090 = vrot.lane.b32.xlu0 %v316, 96
  %v1091 = vpop.permute.xlu0 %1090
  %1092 = vrot.lane.b32.xlu0 %v318, 96
  %v1093 = vpop.permute.xlu0 %1092
  %1094 = vrot.lane.b32.xlu0 %v320, 96
  %v1095 = vpop.permute.xlu0 %1094
  %1096 = vrot.lane.b32.xlu0 %v322, 96
  %v1097 = vpop.permute.xlu0 %1096
  %v1102 = vunpack.c.l.b16 %v1070
  %v1103 = vunpack.c.l.b16 %v1071
  %v1104 = vunpack.c.l.b16 %v1072
  %v1105 = vunpack.c.l.b16 %v1073
  %v1106 = vpack.c.b16 %v1103, %v1102
  %v1107 = vpack.c.b16 %v1105, %v1104
  %v1111 = vsel %vm339, %v1083, 0
  %v1114 = vsel %vm339, %v1085, 0
  %v1117 = vsel %vm339, %v1087, 0
  %v1120 = vsel %vm339, %v1089, 0
  %v1123 = vsel %vm339, %v1091, 0
  %v1126 = vsel %vm339, %v1093, 0
  %v1129 = vsel %vm339, %v1095, 0
  %v1132 = vsel %vm339, %v1097, 0
  %1134 = vmatprep.subr.bf16.mxu0 0
  %1135 = vmatpush1.bf16.msra.mxu0 %v1106
  %1136 = vmatprep.subr.bf16.mxu0 0
  %1137 = vmatpush1.bf16.msra.mxu0 %v1107
  %1138 = vmatprep.subr.bf16.mxu0 0
  %1139 = vmatpush1.bf16.msra.mxu0 0
  %1140 = vmatprep.subr.bf16.mxu0 0
  %1141 = vmatpush1.bf16.msra.mxu0 0
  %1142 = vmatprep.subr.bf16.mxu0 0
  %1143 = vmatpush1.bf16.msra.mxu0 0
  %1144 = vmatprep.subr.bf16.mxu0 0
  %1145 = vmatpush1.bf16.msra.mxu0 0
  %1146 = vmatprep.subr.bf16.mxu0 0
  %1147 = vmatpush1.bf16.msra.mxu0 0
  %1148 = vmatprep.subr.bf16.mxu0 0
  %1149 = vmatpush1.bf16.msra.mxu0 0
  %1150 = vmatprep.subr.bf16.mxu0 0
  %1151 = vmatpush1.bf16.msra.mxu0 0
  %1152 = vmatprep.subr.bf16.mxu0 0
  %1153 = vmatpush1.bf16.msra.mxu0 0
  %1154 = vmatprep.subr.bf16.mxu0 0
  %1155 = vmatpush1.bf16.msra.mxu0 0
  %1156 = vmatprep.subr.bf16.mxu0 0
  %1157 = vmatpush1.bf16.msra.mxu0 0
  %1158 = vmatprep.subr.bf16.mxu0 0
  %1159 = vmatpush1.bf16.msra.mxu0 0
  %1160 = vmatprep.subr.bf16.mxu0 0
  %1161 = vmatpush1.bf16.msra.mxu0 0
  %1162 = vmatprep.subr.bf16.mxu0 0
  %1163 = vmatpush1.bf16.msra.mxu0 0
  %1164 = vmatprep.subr.bf16.mxu0 0
  %1165 = vmatpush1.bf16.msra.mxu0 0
  %1166 = vmatprep.mubr.bf16.mxu0 0
  %1167 = vmatmul.mubr.bf16.gmra.mrb[0].mxu0 %v1111
  %v1168 = vpop.f32.mrb[0].mxu0
  %v1169 = vadd.f32 0.0, %v1168
  %v1170 = vpop.f32.mrb[0].mxu0
  %v1171 = vpop.f32.mrb[0].mxu0
  %v1172 = vadd.f32 0.0, %v1171
  %v1173 = vpop.f32.mrb[0].mxu0
  %1174 = vmatprep.mubr.bf16.mxu0 0
  %1175 = vmatmul.mubr.bf16.gmra.mrb[0].mxu0 %v1114
  %v1176 = vpop.f32.mrb[0].mxu0
  %v1177 = vadd.f32 0.0, %v1176
  %v1178 = vpop.f32.mrb[0].mxu0
  %v1179 = vpop.f32.mrb[0].mxu0
  %v1180 = vadd.f32 0.0, %v1179
  %v1181 = vpop.f32.mrb[0].mxu0
  %1182 = vmatprep.mubr.bf16.mxu0 0
  %1183 = vmatmul.mubr.bf16.gmra.mrb[0].mxu0 %v1117
  %v1184 = vpop.f32.mrb[0].mxu0
  %v1185 = vadd.f32 0.0, %v1184
  %v1186 = vpop.f32.mrb[0].mxu0
  %v1187 = vpop.f32.mrb[0].mxu0
  %v1188 = vadd.f32 0.0, %v1187
  %v1189 = vpop.f32.mrb[0].mxu0
  %1190 = vmatprep.mubr.bf16.mxu0 0
  %1191 = vmatmul.mubr.bf16.gmra.mrb[0].mxu0 %v1120
  %v1192 = vpop.f32.mrb[0].mxu0
  %v1193 = vadd.f32 0.0, %v1192
  %v1194 = vpop.f32.mrb[0].mxu0
  %v1195 = vpop.f32.mrb[0].mxu0
  %v1196 = vadd.f32 0.0, %v1195
  %v1197 = vpop.f32.mrb[0].mxu0
  %1198 = vmatprep.mubr.bf16.mxu0 0
  %1199 = vmatmul.mubr.bf16.gmra.mrb[0].mxu0 %v1123
  %v1200 = vpop.f32.mrb[0].mxu0
  %v1201 = vadd.f32 0.0, %v1200
  %v1202 = vpop.f32.mrb[0].mxu0
  %v1203 = vpop.f32.mrb[0].mxu0
  %v1204 = vadd.f32 0.0, %v1203
  %v1205 = vpop.f32.mrb[0].mxu0
  %1206 = vmatprep.mubr.bf16.mxu0 0
  %1207 = vmatmul.mubr.bf16.gmra.mrb[0].mxu0 %v1126
  %v1208 = vpop.f32.mrb[0].mxu0
  %v1209 = vadd.f32 0.0, %v1208
  %v1210 = vpop.f32.mrb[0].mxu0
  %v1211 = vpop.f32.mrb[0].mxu0
  %v1212 = vadd.f32 0.0, %v1211
  %v1213 = vpop.f32.mrb[0].mxu0
  %1214 = vmatprep.mubr.bf16.mxu0 0
  %1215 = vmatmul.mubr.bf16.gmra.mrb[0].mxu0 %v1129
  %v1216 = vpop.f32.mrb[0].mxu0
  %v1217 = vadd.f32 0.0, %v1216
  %v1218 = vpop.f32.mrb[0].mxu0
  %v1219 = vpop.f32.mrb[0].mxu0
  %v1220 = vadd.f32 0.0, %v1219
  %v1221 = vpop.f32.mrb[0].mxu0
  %1222 = vmatprep.mubr.bf16.mxu0 0
  %1223 = vmatmul.mubr.bf16.gmra.mrb[0].mxu0 %v1132
  %v1224 = vpop.f32.mrb[0].mxu0
  %v1225 = vadd.f32 0.0, %v1224
  %v1226 = vpop.f32.mrb[0].mxu0
  %v1227 = vpop.f32.mrb[0].mxu0
  %v1228 = vadd.f32 0.0, %v1227
  %v1229 = vpop.f32.mrb[0].mxu0
  %1230 = vdwg.mxu0
  %s1231 = scalar_lea.vmem %s3, 96
  %v1232 = vld [vmem:[%s1231] sm:$0xf]
  %v1233 = vld [vmem:[%s1231 + $0x4] sm:$0xf]
  %v1234 = vld [vmem:[%s1231 + $0x8] sm:$0xf]
  %v1235 = vld [vmem:[%s1231 + $0xc] sm:$0xf]
  %1236 = vrot.lane.b32.xlu0 %v308, 64
  %v1237 = vpop.permute.xlu0 %1236
  %1238 = vrot.lane.b32.xlu0 %v310, 64
  %v1239 = vpop.permute.xlu0 %1238
  %1240 = vrot.lane.b32.xlu0 %v312, 64
  %v1241 = vpop.permute.xlu0 %1240
  %1242 = vrot.lane.b32.xlu0 %v314, 64
  %v1243 = vpop.permute.xlu0 %1242
  %1244 = vrot.lane.b32.xlu0 %v316, 64
  %v1245 = vpop.permute.xlu0 %1244
  %1246 = vrot.lane.b32.xlu0 %v318, 64
  %v1247 = vpop.permute.xlu0 %1246
  %1248 = vrot.lane.b32.xlu0 %v320, 64
  %v1249 = vpop.permute.xlu0 %1248
  %1250 = vrot.lane.b32.xlu0 %v322, 64
  %v1251 = vpop.permute.xlu0 %1250
  %v1256 = vunpack.c.l.b16 %v1232
  %v1257 = vunpack.c.l.b16 %v1233
  %v1258 = vunpack.c.l.b16 %v1234
  %v1259 = vunpack.c.l.b16 %v1235
  %v1260 = vpack.c.b16 %v1257, %v1256
  %v1261 = vpack.c.b16 %v1259, %v1258
  %v1265 = vsel %vm339, %v1237, 0
  %v1268 = vsel %vm339, %v1239, 0
  %v1271 = vsel %vm339, %v1241, 0
  %v1274 = vsel %vm339, %v1243, 0
  %v1277 = vsel %vm339, %v1245, 0
  %v1280 = vsel %vm339, %v1247, 0
  %v1283 = vsel %vm339, %v1249, 0
  %v1286 = vsel %vm339, %v1251, 0
  %1288 = vmatprep.subr.bf16.mxu0 0
  %1289 = vmatpush1.bf16.msra.mxu0 %v1260
  %1290 = vmatprep.subr.bf16.mxu0 0
  %1291 = vmatpush1.bf16.msra.mxu0 %v1261
  %1292 = vmatprep.subr.bf16.mxu0 0
  %1293 = vmatpush1.bf16.msra.mxu0 0
  %1294 = vmatprep.subr.bf16.mxu0 0
  %1295 = vmatpush1.bf16.msra.mxu0 0
  %1296 = vmatprep.subr.bf16.mxu0 0
  %1297 = vmatpush1.bf16.msra.mxu0 0
  %1298 = vmatprep.subr.bf16.mxu0 0
  %1299 = vmatpush1.bf16.msra.mxu0 0
  %1300 = vmatprep.subr.bf16.mxu0 0
  %1301 = vmatpush1.bf16.msra.mxu0 0
  %1302 = vmatprep.subr.bf16.mxu0 0
  %1303 = vmatpush1.bf16.msra.mxu0 0
  %1304 = vmatprep.subr.bf16.mxu0 0
  %1305 = vmatpush1.bf16.msra.mxu0 0
  %1306 = vmatprep.subr.bf16.mxu0 0
  %1307 = vmatpush1.bf16.msra.mxu0 0
  %1308 = vmatprep.subr.bf16.mxu0 0
  %1309 = vmatpush1.bf16.msra.mxu0 0
  %1310 = vmatprep.subr.bf16.mxu0 0
  %1311 = vmatpush1.bf16.msra.mxu0 0
  %1312 = vmatprep.subr.bf16.mxu0 0
  %1313 = vmatpush1.bf16.msra.mxu0 0
  %1314 = vmatprep.subr.bf16.mxu0 0
  %1315 = vmatpush1.bf16.msra.mxu0 0
  %1316 = vmatprep.subr.bf16.mxu0 0
  %1317 = vmatpush1.bf16.msra.mxu0 0
  %1318 = vmatprep.subr.bf16.mxu0 0
  %1319 = vmatpush1.bf16.msra.mxu0 0
  %1320 = vmatprep.mubr.bf16.mxu0 0
  %1321 = vmatmul.mubr.bf16.gmra.mrb[0].mxu0 %v1265
  %v1322 = vpop.f32.mrb[0].mxu0
  %v1323 = vadd.f32 0.0, %v1322
  %v1324 = vpop.f32.mrb[0].mxu0
  %v1325 = vpop.f32.mrb[0].mxu0
  %v1326 = vadd.f32 0.0, %v1325
  %v1327 = vpop.f32.mrb[0].mxu0
  %1328 = vmatprep.mubr.bf16.mxu0 0
  %1329 = vmatmul.mubr.bf16.gmra.mrb[0].mxu0 %v1268
  %v1330 = vpop.f32.mrb[0].mxu0
  %v1331 = vadd.f32 0.0, %v1330
  %v1332 = vpop.f32.mrb[0].mxu0
  %v1333 = vpop.f32.mrb[0].mxu0
  %v1334 = vadd.f32 0.0, %v1333
  %v1335 = vpop.f32.mrb[0].mxu0
  %1336 = vmatprep.mubr.bf16.mxu0 0
  %1337 = vmatmul.mubr.bf16.gmra.mrb[0].mxu0 %v1271
  %v1338 = vpop.f32.mrb[0].mxu0
  %v1339 = vadd.f32 0.0, %v1338
  %v1340 = vpop.f32.mrb[0].mxu0
  %v1341 = vpop.f32.mrb[0].mxu0
  %v1342 = vadd.f32 0.0, %v1341
  %v1343 = vpop.f32.mrb[0].mxu0
  %1344 = vmatprep.mubr.bf16.mxu0 0
  %1345 = vmatmul.mubr.bf16.gmra.mrb[0].mxu0 %v1274
  %v1346 = vpop.f32.mrb[0].mxu0
  %v1347 = vadd.f32 0.0, %v1346
  %v1348 = vpop.f32.mrb[0].mxu0
  %v1349 = vpop.f32.mrb[0].mxu0
  %v1350 = vadd.f32 0.0, %v1349
  %v1351 = vpop.f32.mrb[0].mxu0
  %1352 = vmatprep.mubr.bf16.mxu0 0
  %1353 = vmatmul.mubr.bf16.gmra.mrb[0].mxu0 %v1277
  %v1354 = vpop.f32.mrb[0].mxu0
  %v1355 = vadd.f32 0.0, %v1354
  %v1356 = vpop.f32.mrb[0].mxu0
  %v1357 = vpop.f32.mrb[0].mxu0
  %v1358 = vadd.f32 0.0, %v1357
  %v1359 = vpop.f32.mrb[0].mxu0
  %1360 = vmatprep.mubr.bf16.mxu0 0
  %1361 = vmatmul.mubr.bf16.gmra.mrb[0].mxu0 %v1280
  %v1362 = vpop.f32.mrb[0].mxu0
  %v1363 = vadd.f32 0.0, %v1362
  %v1364 = vpop.f32.mrb[0].mxu0
  %v1365 = vpop.f32.mrb[0].mxu0
  %v1366 = vadd.f32 0.0, %v1365
  %v1367 = vpop.f32.mrb[0].mxu0
  %1368 = vmatprep.mubr.bf16.mxu0 0
  %1369 = vmatmul.mubr.bf16.gmra.mrb[0].mxu0 %v1283
  %v1370 = vpop.f32.mrb[0].mxu0
  %v1371 = vadd.f32 0.0, %v1370
  %v1372 = vpop.f32.mrb[0].mxu0
  %v1373 = vpop.f32.mrb[0].mxu0
  %v1374 = vadd.f32 0.0, %v1373
  %v1375 = vpop.f32.mrb[0].mxu0
  %1376 = vmatprep.mubr.bf16.mxu0 0
  %1377 = vmatmul.mubr.bf16.gmra.mrb[0].mxu0 %v1286
  %v1378 = vpop.f32.mrb[0].mxu0
  %v1379 = vadd.f32 0.0, %v1378
  %v1380 = vpop.f32.mrb[0].mxu0
  %v1381 = vpop.f32.mrb[0].mxu0
  %v1382 = vadd.f32 0.0, %v1381
  %v1383 = vpop.f32.mrb[0].mxu0
  %1384 = vdwg.mxu0
  %s1385 = scalar_lea.vmem %s3, 112
  %v1386 = vld [vmem:[%s1385] sm:$0xf]
  %v1387 = vld [vmem:[%s1385 + $0x4] sm:$0xf]
  %v1388 = vld [vmem:[%s1385 + $0x8] sm:$0xf]
  %v1389 = vld [vmem:[%s1385 + $0xc] sm:$0xf]
  %1390 = vrot.lane.b32.xlu0 %v308, 32
  %v1391 = vpop.permute.xlu0 %1390
  %1392 = vrot.lane.b32.xlu0 %v310, 32
  %v1393 = vpop.permute.xlu0 %1392
  %1394 = vrot.lane.b32.xlu0 %v312, 32
  %v1395 = vpop.permute.xlu0 %1394
  %1396 = vrot.lane.b32.xlu0 %v314, 32
  %v1397 = vpop.permute.xlu0 %1396
  %1398 = vrot.lane.b32.xlu0 %v316, 32
  %v1399 = vpop.permute.xlu0 %1398
  %1400 = vrot.lane.b32.xlu0 %v318, 32
  %v1401 = vpop.permute.xlu0 %1400
  %1402 = vrot.lane.b32.xlu0 %v320, 32
  %v1403 = vpop.permute.xlu0 %1402
  %1404 = vrot.lane.b32.xlu0 %v322, 32
  %v1405 = vpop.permute.xlu0 %1404
  %v1410 = vunpack.c.l.b16 %v1386
  %v1411 = vunpack.c.l.b16 %v1387
  %v1412 = vunpack.c.l.b16 %v1388
  %v1413 = vunpack.c.l.b16 %v1389
  %v1414 = vpack.c.b16 %v1411, %v1410
  %v1415 = vpack.c.b16 %v1413, %v1412
  %v1419 = vsel %vm339, %v1391, 0
  %v1422 = vsel %vm339, %v1393, 0
  %v1425 = vsel %vm339, %v1395, 0
  %v1428 = vsel %vm339, %v1397, 0
  %v1431 = vsel %vm339, %v1399, 0
  %v1434 = vsel %vm339, %v1401, 0
  %v1437 = vsel %vm339, %v1403, 0
  %v1440 = vsel %vm339, %v1405, 0
  %1442 = vmatprep.subr.bf16.mxu0 0
  %1443 = vmatpush1.bf16.msra.mxu0 %v1414
  %1444 = vmatprep.subr.bf16.mxu0 0
  %1445 = vmatpush1.bf16.msra.mxu0 %v1415
  %1446 = vmatprep.subr.bf16.mxu0 0
  %1447 = vmatpush1.bf16.msra.mxu0 0
  %1448 = vmatprep.subr.bf16.mxu0 0
  %1449 = vmatpush1.bf16.msra.mxu0 0
  %1450 = vmatprep.subr.bf16.mxu0 0
  %1451 = vmatpush1.bf16.msra.mxu0 0
  %1452 = vmatprep.subr.bf16.mxu0 0
  %1453 = vmatpush1.bf16.msra.mxu0 0
  %1454 = vmatprep.subr.bf16.mxu0 0
  %1455 = vmatpush1.bf16.msra.mxu0 0
  %1456 = vmatprep.subr.bf16.mxu0 0
  %1457 = vmatpush1.bf16.msra.mxu0 0
  %1458 = vmatprep.subr.bf16.mxu0 0
  %1459 = vmatpush1.bf16.msra.mxu0 0
  %1460 = vmatprep.subr.bf16.mxu0 0
  %1461 = vmatpush1.bf16.msra.mxu0 0
  %1462 = vmatprep.subr.bf16.mxu0 0
  %1463 = vmatpush1.bf16.msra.mxu0 0
  %1464 = vmatprep.subr.bf16.mxu0 0
  %1465 = vmatpush1.bf16.msra.mxu0 0
  %1466 = vmatprep.subr.bf16.mxu0 0
  %1467 = vmatpush1.bf16.msra.mxu0 0
  %1468 = vmatprep.subr.bf16.mxu0 0
  %1469 = vmatpush1.bf16.msra.mxu0 0
  %1470 = vmatprep.subr.bf16.mxu0 0
  %1471 = vmatpush1.bf16.msra.mxu0 0
  %1472 = vmatprep.subr.bf16.mxu0 0
  %1473 = vmatpush1.bf16.msra.mxu0 0
  %1474 = vmatprep.mubr.bf16.mxu0 0
  %1475 = vmatmul.mubr.bf16.gmra.mrb[0].mxu0 %v1419
  %v1476 = vpop.f32.mrb[0].mxu0
  %v1477 = vadd.f32 0.0, %v1476
  %v1478 = vpop.f32.mrb[0].mxu0
  %v1479 = vpop.f32.mrb[0].mxu0
  %v1480 = vadd.f32 0.0, %v1479
  %v1481 = vpop.f32.mrb[0].mxu0
  %1482 = vmatprep.mubr.bf16.mxu0 0
  %1483 = vmatmul.mubr.bf16.gmra.mrb[0].mxu0 %v1422
  %v1484 = vpop.f32.mrb[0].mxu0
  %v1485 = vadd.f32 0.0, %v1484
  %v1486 = vpop.f32.mrb[0].mxu0
  %v1487 = vpop.f32.mrb[0].mxu0
  %v1488 = vadd.f32 0.0, %v1487
  %v1489 = vpop.f32.mrb[0].mxu0
  %1490 = vmatprep.mubr.bf16.mxu0 0
  %1491 = vmatmul.mubr.bf16.gmra.mrb[0].mxu0 %v1425
  %v1492 = vpop.f32.mrb[0].mxu0
  %v1493 = vadd.f32 0.0, %v1492
  %v1494 = vpop.f32.mrb[0].mxu0
  %v1495 = vpop.f32.mrb[0].mxu0
  %v1496 = vadd.f32 0.0, %v1495
  %v1497 = vpop.f32.mrb[0].mxu0
  %1498 = vmatprep.mubr.bf16.mxu0 0
  %1499 = vmatmul.mubr.bf16.gmra.mrb[0].mxu0 %v1428
  %v1500 = vpop.f32.mrb[0].mxu0
  %v1501 = vadd.f32 0.0, %v1500
  %v1502 = vpop.f32.mrb[0].mxu0
  %v1503 = vpop.f32.mrb[0].mxu0
  %v1504 = vadd.f32 0.0, %v1503
  %v1505 = vpop.f32.mrb[0].mxu0
  %1506 = vmatprep.mubr.bf16.mxu0 0
  %1507 = vmatmul.mubr.bf16.gmra.mrb[0].mxu0 %v1431
  %v1508 = vpop.f32.mrb[0].mxu0
  %v1509 = vadd.f32 0.0, %v1508
  %v1510 = vpop.f32.mrb[0].mxu0
  %v1511 = vpop.f32.mrb[0].mxu0
  %v1512 = vadd.f32 0.0, %v1511
  %v1513 = vpop.f32.mrb[0].mxu0
  %1514 = vmatprep.mubr.bf16.mxu0 0
  %1515 = vmatmul.mubr.bf16.gmra.mrb[0].mxu0 %v1434
  %v1516 = vpop.f32.mrb[0].mxu0
  %v1517 = vadd.f32 0.0, %v1516
  %v1518 = vpop.f32.mrb[0].mxu0
  %v1519 = vpop.f32.mrb[0].mxu0
  %v1520 = vadd.f32 0.0, %v1519
  %v1521 = vpop.f32.mrb[0].mxu0
  %1522 = vmatprep.mubr.bf16.mxu0 0
  %1523 = vmatmul.mubr.bf16.gmra.mrb[0].mxu0 %v1437
  %v1524 = vpop.f32.mrb[0].mxu0
  %v1525 = vadd.f32 0.0, %v1524
  %v1526 = vpop.f32.mrb[0].mxu0
  %v1527 = vpop.f32.mrb[0].mxu0
  %v1528 = vadd.f32 0.0, %v1527
  %v1529 = vpop.f32.mrb[0].mxu0
  %1530 = vmatprep.mubr.bf16.mxu0 0
  %1531 = vmatmul.mubr.bf16.gmra.mrb[0].mxu0 %v1440
  %v1532 = vpop.f32.mrb[0].mxu0
  %v1533 = vadd.f32 0.0, %v1532
  %v1534 = vpop.f32.mrb[0].mxu0
  %v1535 = vpop.f32.mrb[0].mxu0
  %v1536 = vadd.f32 0.0, %v1535
  %v1537 = vpop.f32.mrb[0].mxu0
  %1538 = vdwg.mxu0
  %1555 = vrot.lane.b32.xlu0 %v561, 16
  %v1556 = vpop.permute.xlu0 %1555
  %1557 = vrot.lane.b32.xlu0 %v564, 16
  %v1558 = vpop.permute.xlu0 %1557
  %1559 = vrot.lane.b32.xlu0 %v569, 16
  %v1560 = vpop.permute.xlu0 %1559
  %1561 = vrot.lane.b32.xlu0 %v572, 16
  %v1562 = vpop.permute.xlu0 %1561
  %1563 = vrot.lane.b32.xlu0 %v577, 16
  %v1564 = vpop.permute.xlu0 %1563
  %1565 = vrot.lane.b32.xlu0 %v580, 16
  %v1566 = vpop.permute.xlu0 %1565
  %1567 = vrot.lane.b32.xlu0 %v585, 16
  %v1568 = vpop.permute.xlu0 %1567
  %1569 = vrot.lane.b32.xlu0 %v588, 16
  %v1570 = vpop.permute.xlu0 %1569
  %1571 = vrot.lane.b32.xlu0 %v593, 16
  %v1572 = vpop.permute.xlu0 %1571
  %1573 = vrot.lane.b32.xlu0 %v596, 16
  %v1574 = vpop.permute.xlu0 %1573
  %1575 = vrot.lane.b32.xlu0 %v601, 16
  %v1576 = vpop.permute.xlu0 %1575
  %1577 = vrot.lane.b32.xlu0 %v604, 16
  %v1578 = vpop.permute.xlu0 %1577
  %1579 = vrot.lane.b32.xlu0 %v609, 16
  %v1580 = vpop.permute.xlu0 %1579
  %1581 = vrot.lane.b32.xlu0 %v612, 16
  %v1582 = vpop.permute.xlu0 %1581
  %1583 = vrot.lane.b32.xlu0 %v617, 16
  %v1584 = vpop.permute.xlu0 %1583
  %1585 = vrot.lane.b32.xlu0 %v620, 16
  %v1586 = vpop.permute.xlu0 %1585
  %1619 = vrot.lane.b32.xlu0 %v715, 32
  %v1620 = vpop.permute.xlu0 %1619
  %1621 = vrot.lane.b32.xlu0 %v718, 32
  %v1622 = vpop.permute.xlu0 %1621
  %1623 = vrot.lane.b32.xlu0 %v723, 32
  %v1624 = vpop.permute.xlu0 %1623
  %1625 = vrot.lane.b32.xlu0 %v726, 32
  %v1626 = vpop.permute.xlu0 %1625
  %1627 = vrot.lane.b32.xlu0 %v731, 32
  %v1628 = vpop.permute.xlu0 %1627
  %1629 = vrot.lane.b32.xlu0 %v734, 32
  %v1630 = vpop.permute.xlu0 %1629
  %1631 = vrot.lane.b32.xlu0 %v739, 32
  %v1632 = vpop.permute.xlu0 %1631
  %1633 = vrot.lane.b32.xlu0 %v742, 32
  %v1634 = vpop.permute.xlu0 %1633
  %1635 = vrot.lane.b32.xlu0 %v747, 32
  %v1636 = vpop.permute.xlu0 %1635
  %1637 = vrot.lane.b32.xlu0 %v750, 32
  %v1638 = vpop.permute.xlu0 %1637
  %1639 = vrot.lane.b32.xlu0 %v755, 32
  %v1640 = vpop.permute.xlu0 %1639
  %1641 = vrot.lane.b32.xlu0 %v758, 32
  %v1642 = vpop.permute.xlu0 %1641
  %1643 = vrot.lane.b32.xlu0 %v763, 32
  %v1644 = vpop.permute.xlu0 %1643
  %1645 = vrot.lane.b32.xlu0 %v766, 32
  %v1646 = vpop.permute.xlu0 %1645
  %1647 = vrot.lane.b32.xlu0 %v771, 32
  %v1648 = vpop.permute.xlu0 %1647
  %1649 = vrot.lane.b32.xlu0 %v774, 32
  %v1650 = vpop.permute.xlu0 %1649
  %1683 = vrot.lane.b32.xlu0 %v869, 48
  %v1684 = vpop.permute.xlu0 %1683
  %1685 = vrot.lane.b32.xlu0 %v872, 48
  %v1686 = vpop.permute.xlu0 %1685
  %1687 = vrot.lane.b32.xlu0 %v877, 48
  %v1688 = vpop.permute.xlu0 %1687
  %1689 = vrot.lane.b32.xlu0 %v880, 48
  %v1690 = vpop.permute.xlu0 %1689
  %1691 = vrot.lane.b32.xlu0 %v885, 48
  %v1692 = vpop.permute.xlu0 %1691
  %1693 = vrot.lane.b32.xlu0 %v888, 48
  %v1694 = vpop.permute.xlu0 %1693
  %1695 = vrot.lane.b32.xlu0 %v893, 48
  %v1696 = vpop.permute.xlu0 %1695
  %1697 = vrot.lane.b32.xlu0 %v896, 48
  %v1698 = vpop.permute.xlu0 %1697
  %1699 = vrot.lane.b32.xlu0 %v901, 48
  %v1700 = vpop.permute.xlu0 %1699
  %1701 = vrot.lane.b32.xlu0 %v904, 48
  %v1702 = vpop.permute.xlu0 %1701
  %1703 = vrot.lane.b32.xlu0 %v909, 48
  %v1704 = vpop.permute.xlu0 %1703
  %1705 = vrot.lane.b32.xlu0 %v912, 48
  %v1706 = vpop.permute.xlu0 %1705
  %1707 = vrot.lane.b32.xlu0 %v917, 48
  %v1708 = vpop.permute.xlu0 %1707
  %1709 = vrot.lane.b32.xlu0 %v920, 48
  %v1710 = vpop.permute.xlu0 %1709
  %1711 = vrot.lane.b32.xlu0 %v925, 48
  %v1712 = vpop.permute.xlu0 %1711
  %1713 = vrot.lane.b32.xlu0 %v928, 48
  %v1714 = vpop.permute.xlu0 %1713
  %1747 = vrot.lane.b32.xlu0 %v1007, 64
  %v1748 = vpop.permute.xlu0 %1747
  %1749 = vrot.lane.b32.xlu0 %v1010, 64
  %v1750 = vpop.permute.xlu0 %1749
  %1751 = vrot.lane.b32.xlu0 %v1015, 64
  %v1752 = vpop.permute.xlu0 %1751
  %1753 = vrot.lane.b32.xlu0 %v1018, 64
  %v1754 = vpop.permute.xlu0 %1753
  %1755 = vrot.lane.b32.xlu0 %v1023, 64
  %v1756 = vpop.permute.xlu0 %1755
  %1757 = vrot.lane.b32.xlu0 %v1026, 64
  %v1758 = vpop.permute.xlu0 %1757
  %1759 = vrot.lane.b32.xlu0 %v1031, 64
  %v1760 = vpop.permute.xlu0 %1759
  %1761 = vrot.lane.b32.xlu0 %v1034, 64
  %v1762 = vpop.permute.xlu0 %1761
  %1763 = vrot.lane.b32.xlu0 %v1039, 64
  %v1764 = vpop.permute.xlu0 %1763
  %1765 = vrot.lane.b32.xlu0 %v1042, 64
  %v1766 = vpop.permute.xlu0 %1765
  %1767 = vrot.lane.b32.xlu0 %v1047, 64
  %v1768 = vpop.permute.xlu0 %1767
  %1769 = vrot.lane.b32.xlu0 %v1050, 64
  %v1770 = vpop.permute.xlu0 %1769
  %1771 = vrot.lane.b32.xlu0 %v1055, 64
  %v1772 = vpop.permute.xlu0 %1771
  %1773 = vrot.lane.b32.xlu0 %v1058, 64
  %v1774 = vpop.permute.xlu0 %1773
  %1775 = vrot.lane.b32.xlu0 %v1063, 64
  %v1776 = vpop.permute.xlu0 %1775
  %1777 = vrot.lane.b32.xlu0 %v1066, 64
  %v1778 = vpop.permute.xlu0 %1777
  %1811 = vrot.lane.b32.xlu0 %v1169, 80
  %v1812 = vpop.permute.xlu0 %1811
  %1813 = vrot.lane.b32.xlu0 %v1172, 80
  %v1814 = vpop.permute.xlu0 %1813
  %1815 = vrot.lane.b32.xlu0 %v1177, 80
  %v1816 = vpop.permute.xlu0 %1815
  %1817 = vrot.lane.b32.xlu0 %v1180, 80
  %v1818 = vpop.permute.xlu0 %1817
  %1819 = vrot.lane.b32.xlu0 %v1185, 80
  %v1820 = vpop.permute.xlu0 %1819
  %1821 = vrot.lane.b32.xlu0 %v1188, 80
  %v1822 = vpop.permute.xlu0 %1821
  %1823 = vrot.lane.b32.xlu0 %v1193, 80
  %v1824 = vpop.permute.xlu0 %1823
  %1825 = vrot.lane.b32.xlu0 %v1196, 80
  %v1826 = vpop.permute.xlu0 %1825
  %1827 = vrot.lane.b32.xlu0 %v1201, 80
  %v1828 = vpop.permute.xlu0 %1827
  %1829 = vrot.lane.b32.xlu0 %v1204, 80
  %v1830 = vpop.permute.xlu0 %1829
  %1831 = vrot.lane.b32.xlu0 %v1209, 80
  %v1832 = vpop.permute.xlu0 %1831
  %1833 = vrot.lane.b32.xlu0 %v1212, 80
  %v1834 = vpop.permute.xlu0 %1833
  %1835 = vrot.lane.b32.xlu0 %v1217, 80
  %v1836 = vpop.permute.xlu0 %1835
  %1837 = vrot.lane.b32.xlu0 %v1220, 80
  %v1838 = vpop.permute.xlu0 %1837
  %1839 = vrot.lane.b32.xlu0 %v1225, 80
  %v1840 = vpop.permute.xlu0 %1839
  %1841 = vrot.lane.b32.xlu0 %v1228, 80
  %v1842 = vpop.permute.xlu0 %1841
  %1875 = vrot.lane.b32.xlu0 %v1323, 96
  %v1876 = vpop.permute.xlu0 %1875
  %1877 = vrot.lane.b32.xlu0 %v1326, 96
  %v1878 = vpop.permute.xlu0 %1877
  %1879 = vrot.lane.b32.xlu0 %v1331, 96
  %v1880 = vpop.permute.xlu0 %1879
  %1881 = vrot.lane.b32.xlu0 %v1334, 96
  %v1882 = vpop.permute.xlu0 %1881
  %1883 = vrot.lane.b32.xlu0 %v1339, 96
  %v1884 = vpop.permute.xlu0 %1883
  %1885 = vrot.lane.b32.xlu0 %v1342, 96
  %v1886 = vpop.permute.xlu0 %1885
  %1887 = vrot.lane.b32.xlu0 %v1347, 96
  %v1888 = vpop.permute.xlu0 %1887
  %1889 = vrot.lane.b32.xlu0 %v1350, 96
  %v1890 = vpop.permute.xlu0 %1889
  %1891 = vrot.lane.b32.xlu0 %v1355, 96
  %v1892 = vpop.permute.xlu0 %1891
  %1893 = vrot.lane.b32.xlu0 %v1358, 96
  %v1894 = vpop.permute.xlu0 %1893
  %1895 = vrot.lane.b32.xlu0 %v1363, 96
  %v1896 = vpop.permute.xlu0 %1895
  %1897 = vrot.lane.b32.xlu0 %v1366, 96
  %v1898 = vpop.permute.xlu0 %1897
  %1899 = vrot.lane.b32.xlu0 %v1371, 96
  %v1900 = vpop.permute.xlu0 %1899
  %1901 = vrot.lane.b32.xlu0 %v1374, 96
  %v1902 = vpop.permute.xlu0 %1901
  %1903 = vrot.lane.b32.xlu0 %v1379, 96
  %v1904 = vpop.permute.xlu0 %1903
  %1905 = vrot.lane.b32.xlu0 %v1382, 96
  %v1906 = vpop.permute.xlu0 %1905
  %1939 = vrot.lane.b32.xlu0 %v1477, 112
  %v1940 = vpop.permute.xlu0 %1939
  %1941 = vrot.lane.b32.xlu0 %v1480, 112
  %v1942 = vpop.permute.xlu0 %1941
  %1943 = vrot.lane.b32.xlu0 %v1485, 112
  %v1944 = vpop.permute.xlu0 %1943
  %1945 = vrot.lane.b32.xlu0 %v1488, 112
  %v1946 = vpop.permute.xlu0 %1945
  %1947 = vrot.lane.b32.xlu0 %v1493, 112
  %v1948 = vpop.permute.xlu0 %1947
  %1949 = vrot.lane.b32.xlu0 %v1496, 112
  %v1950 = vpop.permute.xlu0 %1949
  %1951 = vrot.lane.b32.xlu0 %v1501, 112
  %v1952 = vpop.permute.xlu0 %1951
  %1953 = vrot.lane.b32.xlu0 %v1504, 112
  %v1954 = vpop.permute.xlu0 %1953
  %1955 = vrot.lane.b32.xlu0 %v1509, 112
  %v1956 = vpop.permute.xlu0 %1955
  %1957 = vrot.lane.b32.xlu0 %v1512, 112
  %v1958 = vpop.permute.xlu0 %1957
  %1959 = vrot.lane.b32.xlu0 %v1517, 112
  %v1960 = vpop.permute.xlu0 %1959
  %1961 = vrot.lane.b32.xlu0 %v1520, 112
  %v1962 = vpop.permute.xlu0 %1961
  %1963 = vrot.lane.b32.xlu0 %v1525, 112
  %v1964 = vpop.permute.xlu0 %1963
  %1965 = vrot.lane.b32.xlu0 %v1528, 112
  %v1966 = vpop.permute.xlu0 %1965
  %1967 = vrot.lane.b32.xlu0 %v1533, 112
  %v1968 = vpop.permute.xlu0 %1967
  %1969 = vrot.lane.b32.xlu0 %v1536, 112
  %v1970 = vpop.permute.xlu0 %1969
  %vm1987 = vcmask 130048
  %v1988 = vsel %vm1987, %v399, %v1556
  %v1989 = vsel %vm1987, %v402, %v1558
  %v1990 = vsel %vm1987, %v407, %v1560
  %v1991 = vsel %vm1987, %v410, %v1562
  %v1992 = vsel %vm1987, %v415, %v1564
  %v1993 = vsel %vm1987, %v418, %v1566
  %v1994 = vsel %vm1987, %v423, %v1568
  %v1995 = vsel %vm1987, %v426, %v1570
  %v1996 = vsel %vm1987, %v431, %v1572
  %v1997 = vsel %vm1987, %v434, %v1574
  %v1998 = vsel %vm1987, %v439, %v1576
  %v1999 = vsel %vm1987, %v442, %v1578
  %v2000 = vsel %vm1987, %v447, %v1580
  %v2001 = vsel %vm1987, %v450, %v1582
  %v2002 = vsel %vm1987, %v455, %v1584
  %v2003 = vsel %vm1987, %v458, %v1586
  %v2004 = vsel %vm339, %v1988, %v1620
  %v2005 = vsel %vm339, %v1989, %v1622
  %v2006 = vsel %vm339, %v1990, %v1624
  %v2007 = vsel %vm339, %v1991, %v1626
  %v2008 = vsel %vm339, %v1992, %v1628
  %v2009 = vsel %vm339, %v1993, %v1630
  %v2010 = vsel %vm339, %v1994, %v1632
  %v2011 = vsel %vm339, %v1995, %v1634
  %v2012 = vsel %vm339, %v1996, %v1636
  %v2013 = vsel %vm339, %v1997, %v1638
  %v2014 = vsel %vm339, %v1998, %v1640
  %v2015 = vsel %vm339, %v1999, %v1642
  %v2016 = vsel %vm339, %v2000, %v1644
  %v2017 = vsel %vm339, %v2001, %v1646
  %v2018 = vsel %vm339, %v2002, %v1648
  %v2019 = vsel %vm339, %v2003, %v1650
  %vm2020 = vcmask 392192
  %v2021 = vsel %vm2020, %v2004, %v1684
  %v2022 = vsel %vm2020, %v2005, %v1686
  %v2023 = vsel %vm2020, %v2006, %v1688
  %v2024 = vsel %vm2020, %v2007, %v1690
  %v2025 = vsel %vm2020, %v2008, %v1692
  %v2026 = vsel %vm2020, %v2009, %v1694
  %v2027 = vsel %vm2020, %v2010, %v1696
  %v2028 = vsel %vm2020, %v2011, %v1698
  %v2029 = vsel %vm2020, %v2012, %v1700
  %v2030 = vsel %vm2020, %v2013, %v1702
  %v2031 = vsel %vm2020, %v2014, %v1704
  %v2032 = vsel %vm2020, %v2015, %v1706
  %v2033 = vsel %vm2020, %v2016, %v1708
  %v2034 = vsel %vm2020, %v2017, %v1710
  %v2035 = vsel %vm2020, %v2018, %v1712
  %v2036 = vsel %vm2020, %v2019, %v1714
  %v2037 = vsel %vm137, %v2021, %v1748
  %v2038 = vsel %vm137, %v2022, %v1750
  %v2039 = vsel %vm137, %v2023, %v1752
  %v2040 = vsel %vm137, %v2024, %v1754
  %v2041 = vsel %vm137, %v2025, %v1756
  %v2042 = vsel %vm137, %v2026, %v1758
  %v2043 = vsel %vm137, %v2027, %v1760
  %v2044 = vsel %vm137, %v2028, %v1762
  %v2045 = vsel %vm137, %v2029, %v1764
  %v2046 = vsel %vm137, %v2030, %v1766
  %v2047 = vsel %vm137, %v2031, %v1768
  %v2048 = vsel %vm137, %v2032, %v1770
  %v2049 = vsel %vm137, %v2033, %v1772
  %v2050 = vsel %vm137, %v2034, %v1774
  %v2051 = vsel %vm137, %v2035, %v1776
  %v2052 = vsel %vm137, %v2036, %v1778
  %vm2053 = vcmask 654336
  %v2054 = vsel %vm2053, %v2037, %v1812
  %v2055 = vsel %vm2053, %v2038, %v1814
  %v2056 = vsel %vm2053, %v2039, %v1816
  %v2057 = vsel %vm2053, %v2040, %v1818
  %v2058 = vsel %vm2053, %v2041, %v1820
  %v2059 = vsel %vm2053, %v2042, %v1822
  %v2060 = vsel %vm2053, %v2043, %v1824
  %v2061 = vsel %vm2053, %v2044, %v1826
  %v2062 = vsel %vm2053, %v2045, %v1828
  %v2063 = vsel %vm2053, %v2046, %v1830
  %v2064 = vsel %vm2053, %v2047, %v1832
  %v2065 = vsel %vm2053, %v2048, %v1834
  %v2066 = vsel %vm2053, %v2049, %v1836
  %v2067 = vsel %vm2053, %v2050, %v1838
  %v2068 = vsel %vm2053, %v2051, %v1840
  %v2069 = vsel %vm2053, %v2052, %v1842
  %vm2070 = vcmask 785408
  %v2071 = vsel %vm2070, %v2054, %v1876
  %v2072 = vsel %vm2070, %v2055, %v1878
  %v2073 = vsel %vm2070, %v2056, %v1880
  %v2074 = vsel %vm2070, %v2057, %v1882
  %v2075 = vsel %vm2070, %v2058, %v1884
  %v2076 = vsel %vm2070, %v2059, %v1886
  %v2077 = vsel %vm2070, %v2060, %v1888
  %v2078 = vsel %vm2070, %v2061, %v1890
  %v2079 = vsel %vm2070, %v2062, %v1892
  %v2080 = vsel %vm2070, %v2063, %v1894
  %v2081 = vsel %vm2070, %v2064, %v1896
  %v2082 = vsel %vm2070, %v2065, %v1898
  %v2083 = vsel %vm2070, %v2066, %v1900
  %v2084 = vsel %vm2070, %v2067, %v1902
  %v2085 = vsel %vm2070, %v2068, %v1904
  %v2086 = vsel %vm2070, %v2069, %v1906
  %vm2087 = vcmask 916480
  %v2088 = vsel %vm2087, %v2071, %v1940
  %v2089 = vsel %vm2087, %v2072, %v1942
  %v2090 = vsel %vm2087, %v2073, %v1944
  %v2091 = vsel %vm2087, %v2074, %v1946
  %v2092 = vsel %vm2087, %v2075, %v1948
  %v2093 = vsel %vm2087, %v2076, %v1950
  %v2094 = vsel %vm2087, %v2077, %v1952
  %v2095 = vsel %vm2087, %v2078, %v1954
  %v2096 = vsel %vm2087, %v2079, %v1956
  %v2097 = vsel %vm2087, %v2080, %v1958
  %v2098 = vsel %vm2087, %v2081, %v1960
  %v2099 = vsel %vm2087, %v2082, %v1962
  %v2100 = vsel %vm2087, %v2083, %v1964
  %v2101 = vsel %vm2087, %v2084, %v1966
  %v2102 = vsel %vm2087, %v2085, %v1968
  %v2103 = vsel %vm2087, %v2086, %v1970
  %v2104 = vld [vmem:[%s4] sm:$0x1]
  %v2106 = vlaneseq
  %v2107 = vshrl.u32 %v2106, 7
  %v2108 = vsub.s32 0, %v2107
  %v2109 = vrot.slane %v2104, %v2108
  %v2111 = vadd.f32 %v2088, %v2109
  %v2112 = vadd.f32 %v2089, %v2109
  %v2113 = vadd.f32 %v2090, %v2109
  %v2114 = vadd.f32 %v2091, %v2109
  %v2115 = vadd.f32 %v2092, %v2109
  %v2116 = vadd.f32 %v2093, %v2109
  %v2117 = vadd.f32 %v2094, %v2109
  %v2118 = vadd.f32 %v2095, %v2109
  %v2119 = vadd.f32 %v2096, %v2109
  %v2120 = vadd.f32 %v2097, %v2109
  %v2121 = vadd.f32 %v2098, %v2109
  %v2122 = vadd.f32 %v2099, %v2109
  %v2123 = vadd.f32 %v2100, %v2109
  %v2124 = vadd.f32 %v2101, %v2109
  %v2125 = vadd.f32 %v2102, %v2109
  %v2126 = vadd.f32 %v2103, %v2109
  %2127 = vst [vmem:[%s5] sm:$0xff] %v2111
  %2128 = vst [vmem:[%s5 + $0x8] sm:$0xff] %v2112
  %2129 = vst [vmem:[%s5 + $0x10] sm:$0xff] %v2113
  %2130 = vst [vmem:[%s5 + $0x18] sm:$0xff] %v2114
  %2131 = vst [vmem:[%s5 + $0x20] sm:$0xff] %v2115
  %2132 = vst [vmem:[%s5 + $0x28] sm:$0xff] %v2116
  %2133 = vst [vmem:[%s5 + $0x30] sm:$0xff] %v2117
  %2134 = vst [vmem:[%s5 + $0x38] sm:$0xff] %v2118
  %2135 = vst [vmem:[%s5 + $0x40] sm:$0xff] %v2119
  %2136 = vst [vmem:[%s5 + $0x48] sm:$0xff] %v2120
  %2137 = vst [vmem:[%s5 + $0x50] sm:$0xff] %v2121
  %2138 = vst [vmem:[%s5 + $0x58] sm:$0xff] %v2122
  %2139 = vst [vmem:[%s5 + $0x60] sm:$0xff] %v2123
  %2140 = vst [vmem:[%s5 + $0x68] sm:$0xff] %v2124
  %2141 = vst [vmem:[%s5 + $0x70] sm:$0xff] %v2125
  %2142 = vst [vmem:[%s5 + $0x78] sm:$0xff] %v2126
  // Predicated region
  $region22: #{experts_forward.1} parent=0 // pred_check
    _
  $region23: #{experts_forward.1} parent=0 // pred_check_branch
    %2144 = sbr.rel (0) target = $region25
  $region24: #{experts_forward.1} parent=0 // pred_region
    _
  $region25: #{experts_forward.1} parent=0 // pred_fallthru
    _
  // Predicated region
  $region26: #{experts_forward.1} parent=0 // pred_check
    _
  $region27: #{experts_forward.1} parent=0 // pred_check_branch
    %2146 = sbr.rel (0) target = $region29
  $region28: #{experts_forward.1} parent=0 // pred_region
    _
  $region29: #{experts_forward.1} parent=0 // pred_fallthru
    _

</llo_original>
